<compile_context>
chip_gen: v7x
topology: tpu7x:2x2x1
jax: 0.10.0
libtpu: 0.0.40
codegen_flags: <defaults>
</compile_context>

<pallas_src>
import functools

import jax
import jax.numpy as jnp
from jax.experimental import pallas as pl
from jax.experimental.pallas import tpu as pltpu


def _temporal_block_kernel(x_ref, w1_ref, b1_ref, w2_ref, b2_ref, *rest,
                           K, dilation, pad, TL, has_downsample, carry_halo):
    """One (batch row, time tile) grid step.

    x_ref     : (1, Cin, TL)     bf16 input tile (channels=sublanes, time=lanes)
    w1_ref    : (Cout, K*Cin)    bf16 conv1 weight, taps flattened into contraction
    w2_ref    : (Cout, K*Cout)   bf16 conv2 weight
    wd_ref    : (Cout, Cin)      bf16 1x1 downsample weight   (only if Cin != Cout)
    b*_ref    : (Cout, 1)        f32 biases (lane-broadcast)
    o_ref     : (1, Cout, TL)    output tile
    xhalo_ref : (Cin,  pad)      bf16 causal halo of x   (carried across time tiles)
    hhalo_ref : (Cout, pad)      bf16 causal halo of conv1 output
    xcol_ref  : (K*Cin,  TL)     bf16 im2col staging for conv1
    hcol_ref  : (K*Cout, TL)     bf16 im2col staging for conv2
    """
    if has_downsample:
        (wd_ref, bd_ref, o_ref,
         xhalo_ref, hhalo_ref, xcol_ref, hcol_ref) = rest
    else:
        (o_ref, xhalo_ref, hhalo_ref, xcol_ref, hcol_ref) = rest

    t = pl.program_id(1)
    Cin = x_ref.shape[1]
    Cout = o_ref.shape[1]

    if pad > 0:
        @pl.when(t == 0)
        def _():
            # Causal zero padding for the first time tile of every sequence.
            xhalo_ref[...] = jnp.zeros(xhalo_ref.shape, xhalo_ref.dtype)
            hhalo_ref[...] = jnp.zeros(hhalo_ref.shape, hhalo_ref.dtype)

    x_tile = x_ref[0]                                   # (Cin, TL) bf16

    def stage_taps(col_ref, halo_ref, tile, C):
        # im2col: write the K dilated tap windows once into a (K*C, TL) staging
        # buffer so the conv becomes ONE wide MXU contraction instead of K
        # accumulated narrow dots.
        for k in range(K):
            lead = pad - k * dilation            # columns sourced from the halo
            rows = pl.ds(k * C, C)
            if lead <= 0:
                col_ref[rows, :] = tile
            elif lead >= TL:                     # whole window lies in the halo
                col_ref[rows, :] = halo_ref[:, pl.ds(k * dilation, TL)]
            else:
                col_ref[rows, pl.ds(0, lead)] = halo_ref[:, pl.ds(k * dilation, lead)]
                col_ref[rows, pl.ds(lead, TL - lead)] = tile[:, :TL - lead]

    # ---- conv1 + bias + ReLU (dropout = identity in eval) ----
    stage_taps(xcol_ref, xhalo_ref, x_tile, Cin)
    h = jnp.dot(w1_ref[...], xcol_ref[...], preferred_element_type=jnp.float32)
    h = jnp.maximum(h + b1_ref[...], 0.0)
    h_bf = h.astype(jnp.bfloat16)

    # ---- conv2 + bias + ReLU ----
    stage_taps(hcol_ref, hhalo_ref, h_bf, Cout)
    out = jnp.dot(w2_ref[...], hcol_ref[...], preferred_element_type=jnp.float32)
    out = jnp.maximum(out + b2_ref[...], 0.0)

    # ---- carry the last `pad` columns forward for the next sequential tile ----
    if pad > 0 and carry_halo:
        xhalo_ref[...] = x_tile[:, TL - pad:]
        hhalo_ref[...] = h_bf[:, TL - pad:]

    # ---- residual branch + final ReLU ----
    if has_downsample:
        res = jnp.dot(wd_ref[...], x_tile,
                      preferred_element_type=jnp.float32) + bd_ref[...]
    else:
        # Note: uses the bf16-cast x (intentional precision trade, avoids a
        # second f32 copy of the input in HBM/VMEM).
        res = x_tile.astype(jnp.float32)

    o_ref[0] = jnp.maximum(out + res, 0.0).astype(o_ref.dtype)


def _vmem_estimate(Cin, Cout, K, TL, pad, out_bytes, wrep):
    """Rough per-step VMEM footprint: double-buffered x/out blocks + weights
    (wrep buffers) + halo carries + im2col staging."""
    halo = max(pad, 1)
    b = 2 * Cin * TL * 2                                     # x block, 2 bufs, bf16
    b += 2 * Cout * TL * out_bytes                           # out block, 2 bufs
    b += wrep * 2 * (Cout * K * Cin + Cout * K * Cout + Cout * Cin)  # weights bf16
    b += wrep * 4 * 3 * Cout                                 # biases f32
    b += 2 * (Cin + Cout) * halo                             # halo carries bf16
    b += 2 * (K * Cin + K * Cout) * TL                       # im2col staging bf16
    return b


def _pick_time_tile(L, Cin, Cout, K, pad, out_bytes, budget=40 << 20):
    """Largest lane-aligned tile dividing L whose footprint fits a VMEM budget
    that is safe on all generations (v7x has only 64 MiB physical VMEM)."""
    for tl in (4096, 2048, 1024, 512, 256, 128):
        if (L % tl == 0 and tl >= pad
                and _vmem_estimate(Cin, Cout, K, tl, pad, out_bytes, 2) <= budget):
            return tl
    if L % 128 == 0:
        return 128
    if L <= 4096:
        return L          # short, non-lane-aligned sequence: one full-length tile
    return 512            # wrapper right-pads L up to a multiple of this


def temporal_block(x, w1, b1, w2, b2, wd=None, bd=None, *,
                   kernel_size, dilation, time_tile=None,
                   out_dtype=jnp.bfloat16):
    """TemporalBlock forward.  x: (B, Cin, L) -> (B, Cout, L) (PyTorch layout)."""
    B, Cin, L = x.shape
    Cout = w1.shape[0]
    K = kernel_size
    pad = (K - 1) * dilation
    has_downsample = (Cin != Cout)
    if has_downsample:
        assert wd is not None and bd is not None
    out_bytes = jnp.dtype(out_dtype).itemsize

    # ---- time tiling -------------------------------------------------------
    TL = _pick_time_tile(L, Cin, Cout, K, pad, out_bytes) if time_tile is None \
        else time_tile
    if L > TL and pad > TL:
        # Halo carry needs at least `pad` columns per tile.
        TL = -(-pad // 128) * 128
    L_pad = -(-L // TL) * TL
    NT = L_pad // TL
    assert TL % 128 == 0 or TL == L_pad, "time tile must be lane-aligned or full"
    assert NT == 1 or pad <= TL
    carry_halo = NT > 1
    halo_w = max(pad, 1)

    # ---- parameter glue (host-side, tiny) ----------------------------------
    x_bf = x.astype(jnp.bfloat16)                                    # (B,Cin,L)
    if L_pad != L:
        # Zero right-pad: extra tail outputs are computed and then dropped.
        x_bf = jnp.pad(x_bf, ((0, 0), (0, 0), (0, L_pad - L)))
    # Flatten taps into the contraction dim: w_flat[o, k*Cin + c] = w[o, c, k].
    w1_f = jnp.transpose(w1, (0, 2, 1)).reshape(Cout, K * Cin).astype(jnp.bfloat16)
    w2_f = jnp.transpose(w2, (0, 2, 1)).reshape(Cout, K * Cout).astype(jnp.bfloat16)
    b1_r = b1.reshape(Cout, 1).astype(jnp.float32)
    b2_r = b2.reshape(Cout, 1).astype(jnp.float32)
    if has_downsample:
        wd_m = wd[:, :, 0].astype(jnp.bfloat16)                      # (Cout,Cin)
        bd_r = bd.reshape(Cout, 1).astype(jnp.float32)

    kernel = functools.partial(
        _temporal_block_kernel, K=K, dilation=dilation, pad=pad, TL=TL,
        has_downsample=has_downsample, carry_halo=carry_halo)

    flops = 2 * B * L_pad * K * Cout * (Cin + Cout)
    bytes_accessed = (x_bf.size * 2 + B * Cout * L_pad * out_bytes
                      + (w1_f.size + w2_f.size) * 2
                      + (b1_r.size + b2_r.size) * 4)
    if has_downsample:
        flops += 2 * B * L_pad * Cin * Cout
        bytes_accessed += wd_m.size * 2 + bd_r.size * 4

    # TODO(synk): for tiny channel counts (C <= 16), process several batch rows
    # per grid step (or fold batch into lanes) to amortize per-step overhead
    # and feed the MXU better.
    def _run(single_buffer_weights):
        pm = pl.Buffered(1) if single_buffer_weights else None

        def const_spec(shape):
            idx = lambda b, t: (0,) * len(shape)
            if pm is None:
                return pl.BlockSpec(shape, idx)
            return pl.BlockSpec(shape, idx, pipeline_mode=pm)

        in_specs = [pl.BlockSpec((1, Cin, TL), lambda b, t: (b, 0, t)),
                    const_spec((Cout, K * Cin)),
                    const_spec((Cout, 1)),
                    const_spec((Cout, K * Cout)),
                    const_spec((Cout, 1))]
        args = [x_bf, w1_f, b1_r, w2_f, b2_r]
        if has_downsample:
            in_specs += [const_spec((Cout, Cin)), const_spec((Cout, 1))]
            args += [wd_m, bd_r]

        wrep = 1 if single_buffer_weights else 2
        vmem_est = _vmem_estimate(Cin, Cout, K, TL, pad, out_bytes, wrep)
        vmem_limit = min(48 << 20, max(16 << 20, int(vmem_est * 1.5) + (2 << 20)))

        return pl.pallas_call(
            kernel,
            out_shape=jax.ShapeDtypeStruct((B, Cout, L_pad), out_dtype),
            grid_spec=pltpu.PrefetchScalarGridSpec(
                num_scalar_prefetch=0,
                grid=(B, NT),
                in_specs=in_specs,
                out_specs=pl.BlockSpec((1, Cout, TL), lambda b, t: (b, 0, t)),
                scratch_shapes=[
                    pltpu.VMEM((Cin, halo_w), jnp.bfloat16),     # x causal halo
                    pltpu.VMEM((Cout, halo_w), jnp.bfloat16),    # conv1-out halo
                    pltpu.VMEM((K * Cin, TL), jnp.bfloat16),     # conv1 im2col
                    pltpu.VMEM((K * Cout, TL), jnp.bfloat16),    # conv2 im2col
                ],
            ),
            compiler_params=pltpu.CompilerParams(
                # Time axis must stay sequential ("arbitrary"): the causal halo
                # is carried across time tiles in scratch.
                # TODO(synk): v7x megacore — fetch/recompute the halo from HBM
                # so the time axis can also be marked "parallel".
                dimension_semantics=("parallel", "arbitrary"),
                vmem_limit_bytes=vmem_limit,
            ),
            cost_estimate=pl.CostEstimate(flops=flops, transcendentals=0,
                                          bytes_accessed=bytes_accessed),
        )(*args)

    try:
        out = _run(True)        # weights/biases single-buffered (constant blocks)
    except Exception:           # pipeline_mode=Buffered(1) unsupported -> default
        out = _run(False)

    if L_pad != L:
        out = out[:, :, :L]
    return out


def _weight_norm_effective(v, g):
    """torch.nn.utils.weight_norm with dim=0: w = g * v / ||v||_(over dims>0)."""
    norm = jnp.sqrt(jnp.sum(v * v, axis=tuple(range(1, v.ndim)), keepdims=True))
    return g.reshape((-1,) + (1,) * (v.ndim - 1)) * v / norm


def _reference(x, w1, b1, w2, b2, wd, bd, kernel_size, dilation):
    """Pure-JAX f32 reference of the same forward pass."""
    pad = (kernel_size - 1) * dilation

    def causal_conv(inp, w, b):  # inp (B, Cin, L), w (Cout, Cin, K)
        xp = jnp.pad(inp, ((0, 0), (0, 0), (pad, 0)))
        L = inp.shape[2]
        out = jnp.zeros((inp.shape[0], w.shape[0], L), jnp.float32)
        for k in range(kernel_size):
            out = out + jnp.einsum('bcl,oc->bol',
                                   xp[:, :, k * dilation:k * dilation + L],
                                   w[:, :, k])
        return out + b[None, :, None]

    h = jax.nn.relu(causal_conv(x, w1, b1))
    out = jax.nn.relu(causal_conv(h, w2, b2))
    if wd is not None:
        res = jnp.einsum('bcl,oc->bol', x, wd[:, :, 0]) + bd[None, :, None]
    else:
        res = x
    return jax.nn.relu(out + res)


if __name__ == "__main__":
    kernel_size, dilation = 3, 2

    def make_params(key, Cin, Cout, with_downsample):
        k1, k2, k3, k4, k5, k6 = jax.random.split(key, 6)
        # weight_norm init: g = ||v||, so the effective forward weight equals v.
        v1 = 0.01 * jax.random.normal(k1, (Cout, Cin, kernel_size), jnp.float32)
        w1 = _weight_norm_effective(v1, jnp.sqrt(jnp.sum(v1 * v1, axis=(1, 2))))
        b1 = 0.1 * jax.random.normal(k2, (Cout,), jnp.float32)
        v2 = 0.01 * jax.random.normal(k3, (Cout, Cout, kernel_size), jnp.float32)
        w2 = _weight_norm_effective(v2, jnp.sqrt(jnp.sum(v2 * v2, axis=(1, 2))))
        b2 = 0.1 * jax.random.normal(k4, (Cout,), jnp.float32)
        if with_downsample:
            wd = 0.01 * jax.random.normal(k5, (Cout, Cin, 1), jnp.float32)
            bd = 0.1 * jax.random.normal(k6, (Cout,), jnp.float32)
        else:
            wd, bd = None, None
        return w1, b1, w2, b2, wd, bd

    root = jax.random.PRNGKey(0)
    kp1, kx1, kp2, kx2 = jax.random.split(root, 4)

    # Case 1: small module-like shapes (Batch, input_channel, seq_len) with a
    # 1x1 downsample on the residual (Cin != Cout); single full-length tile.
    B, Cin, Cout, L = 2, 4, 8, 16
    w1, b1, w2, b2, wd, bd = make_params(kp1, Cin, Cout, True)
    x = jax.random.normal(kx1, (B, Cin, L), jnp.float32)
    y = jax.block_until_ready(
        temporal_block(x, w1, b1, w2, b2, wd, bd,
                       kernel_size=kernel_size, dilation=dilation))
    y_ref = _reference(x, w1, b1, w2, b2, wd, bd, kernel_size, dilation)
    assert y.shape == (B, Cout, L)
    assert jnp.allclose(y.astype(jnp.float32), y_ref, atol=2e-2, rtol=2e-2), \
        float(jnp.max(jnp.abs(y.astype(jnp.float32) - y_ref)))

    # Case 2: longer sequence exercising the time-tiled grid + causal halo
    # carry, identity residual (Cin == Cout, no downsample).
    B2, C2, L2 = 2, 8, 256
    w1, b1, w2, b2, wd, bd = make_params(kp2, C2, C2, False)
    x2 = jax.random.normal(kx2, (B2, C2, L2), jnp.float32)
    y2 = jax.block_until_ready(
        temporal_block(x2, w1, b1, w2, b2, wd, bd,
                       kernel_size=kernel_size, dilation=dilation,
                       time_tile=128))
    y2_ref = _reference(x2, w1, b1, w2, b2, wd, bd, kernel_size, dilation)
    assert y2.shape == (B2, C2, L2)
    assert jnp.allclose(y2.astype(jnp.float32), y2_ref, atol=2e-2, rtol=2e-2), \
        float(jnp.max(jnp.abs(y2.astype(jnp.float32) - y2_ref)))

    print("KERNEL_OK")
</pallas_src>

<mosaic_0001>
module attributes {stable_mosaic.version = 11 : i64} {
  func.func @_temporal_block_kernel(%arg0: i32, %arg1: i32, %arg2: memref<1x4x16xbf16, #tpu.memory_space<vmem>>, %arg3: memref<8x12xbf16, #tpu.memory_space<vmem>>, %arg4: memref<8x1xf32, #tpu.memory_space<vmem>>, %arg5: memref<8x24xbf16, #tpu.memory_space<vmem>>, %arg6: memref<8x1xf32, #tpu.memory_space<vmem>>, %arg7: memref<8x4xbf16, #tpu.memory_space<vmem>>, %arg8: memref<8x1xf32, #tpu.memory_space<vmem>>, %arg9: memref<1x8x16xbf16, #tpu.memory_space<vmem>>, %arg10: memref<4x4xbf16, #tpu.memory_space<vmem>>, %arg11: memref<8x4xbf16, #tpu.memory_space<vmem>>, %arg12: memref<12x16xbf16, #tpu.memory_space<vmem>>, %arg13: memref<24x16xbf16, #tpu.memory_space<vmem>>) attributes {dimension_semantics = [#tpu.dimension_semantics<parallel>, #tpu.dimension_semantics<arbitrary>], iteration_bounds = array<i64: 2, 1>, scalar_prefetch = 0 : i64, scratch_operands = 4 : i64, tpu.core_type = #tpu.core_type<tc>, window_params = [{transform_indices = @transform_0, window_bounds = array<i64: 1, 4, 16>}, {pipeline_mode = #tpu.pipeline_mode<synchronous>, transform_indices = @transform_1, window_bounds = array<i64: 8, 12>}, {pipeline_mode = #tpu.pipeline_mode<synchronous>, transform_indices = @transform_2, window_bounds = array<i64: 8, 1>}, {pipeline_mode = #tpu.pipeline_mode<synchronous>, transform_indices = @transform_3, window_bounds = array<i64: 8, 24>}, {pipeline_mode = #tpu.pipeline_mode<synchronous>, transform_indices = @transform_4, window_bounds = array<i64: 8, 1>}, {pipeline_mode = #tpu.pipeline_mode<synchronous>, transform_indices = @transform_5, window_bounds = array<i64: 8, 4>}, {pipeline_mode = #tpu.pipeline_mode<synchronous>, transform_indices = @transform_6, window_bounds = array<i64: 8, 1>}, {transform_indices = @transform_7, window_bounds = array<i64: 1, 8, 16>}]} {
    %c0_i32 = arith.constant 0 : i32
    %0 = arith.cmpi eq, %arg1, %c0_i32 : i32
    %1 = arith.extui %0 : i1 to i32
    %c0_i32_0 = arith.constant 0 : i32
    %2 = arith.cmpi ne, %1, %c0_i32_0 : i32
    scf.if %2 {
      %cst_51 = arith.constant 0.000000e+00 : bf16
      %52 = vector.broadcast %cst_51 : bf16 to vector<4x4xbf16>
      %c0_52 = arith.constant 0 : index
      %c0_53 = arith.constant 0 : index
      %53 = vector.load %arg10[%c0_52, %c0_53] : memref<4x4xbf16, #tpu.memory_space<vmem>>, vector<4x4xbf16>
      tpu.vector_store %arg10[%c0_52, %c0_53], %52 {strides = array<i32>} : memref<4x4xbf16, #tpu.memory_space<vmem>>, vector<4x4xbf16>,
      %cst_54 = arith.constant 0.000000e+00 : bf16
      %54 = vector.broadcast %cst_54 : bf16 to vector<8x4xbf16>
      %c0_55 = arith.constant 0 : index
      %c0_56 = arith.constant 0 : index
      %55 = vector.load %arg11[%c0_55, %c0_56] : memref<8x4xbf16, #tpu.memory_space<vmem>>, vector<8x4xbf16>
      tpu.vector_store %arg11[%c0_55, %c0_56], %54 {strides = array<i32>} : memref<8x4xbf16, #tpu.memory_space<vmem>>, vector<8x4xbf16>,
    } else {
    }
    %c0 = arith.constant 0 : index
    %c0_1 = arith.constant 0 : index
    %c0_2 = arith.constant 0 : index
    %3 = vector.load %arg2[%c0, %c0_1, %c0_2] : memref<1x4x16xbf16, #tpu.memory_space<vmem>>, vector<1x4x16xbf16>
    %4 = vector.shape_cast %3 : vector<1x4x16xbf16> to vector<4x16xbf16>
    %c0_3 = arith.constant 0 : index
    %c0_4 = arith.constant 0 : index
    %5 = vector.load %arg10[%c0_3, %c0_4] : memref<4x4xbf16, #tpu.memory_space<vmem>>, vector<4x4xbf16>
    %c0_5 = arith.constant 0 : index
    %c0_6 = arith.constant 0 : index
    %6 = vector.load %arg12[%c0_5, %c0_6] : memref<12x16xbf16, #tpu.memory_space<vmem>>, vector<4x4xbf16>
    tpu.vector_store %arg12[%c0_5, %c0_6], %5 {strides = array<i32>} : memref<12x16xbf16, #tpu.memory_space<vmem>>, vector<4x4xbf16>,
    %7 = vector.extract_strided_slice %4 {offsets = [0, 0], sizes = [4, 12], strides = [1, 1]} : vector<4x16xbf16> to vector<4x12xbf16>
    %c0_7 = arith.constant 0 : index
    %c4 = arith.constant 4 : index
    %8 = vector.load %arg12[%c0_7, %c4] : memref<12x16xbf16, #tpu.memory_space<vmem>>, vector<4x12xbf16>
    tpu.vector_store %arg12[%c0_7, %c4], %7 {strides = array<i32>} : memref<12x16xbf16, #tpu.memory_space<vmem>>, vector<4x12xbf16>,
    %c0_8 = arith.constant 0 : index
    %c2 = arith.constant 2 : index
    %9 = vector.load %arg10[%c0_8, %c2] : memref<4x4xbf16, #tpu.memory_space<vmem>>, vector<4x2xbf16>
    %c4_9 = arith.constant 4 : index
    %c0_10 = arith.constant 0 : index
    %10 = vector.load %arg12[%c4_9, %c0_10] : memref<12x16xbf16, #tpu.memory_space<vmem>>, vector<4x2xbf16>
    tpu.vector_store %arg12[%c4_9, %c0_10], %9 {strides = array<i32>} : memref<12x16xbf16, #tpu.memory_space<vmem>>, vector<4x2xbf16>,
    %11 = vector.extract_strided_slice %4 {offsets = [0, 0], sizes = [4, 14], strides = [1, 1]} : vector<4x16xbf16> to vector<4x14xbf16>
    %c4_11 = arith.constant 4 : index
    %c2_12 = arith.constant 2 : index
    %12 = vector.load %arg12[%c4_11, %c2_12] : memref<12x16xbf16, #tpu.memory_space<vmem>>, vector<4x14xbf16>
    tpu.vector_store %arg12[%c4_11, %c2_12], %11 {strides = array<i32>} : memref<12x16xbf16, #tpu.memory_space<vmem>>, vector<4x14xbf16>,
    %c8 = arith.constant 8 : index
    %c0_13 = arith.constant 0 : index
    %13 = vector.load %arg12[%c8, %c0_13] : memref<12x16xbf16, #tpu.memory_space<vmem>>, vector<4x16xbf16>
    tpu.vector_store %arg12[%c8, %c0_13], %4 {strides = array<i32>} : memref<12x16xbf16, #tpu.memory_space<vmem>>, vector<4x16xbf16>,
    %c0_14 = arith.constant 0 : index
    %c0_15 = arith.constant 0 : index
    %14 = vector.load %arg3[%c0_14, %c0_15] : memref<8x12xbf16, #tpu.memory_space<vmem>>, vector<8x12xbf16>
    %c0_16 = arith.constant 0 : index
    %c0_17 = arith.constant 0 : index
    %15 = vector.load %arg12[%c0_16, %c0_17] : memref<12x16xbf16, #tpu.memory_space<vmem>>, vector<12x16xbf16>
    %cst = arith.constant dense<0.000000e+00> : vector<8x16xf32>
    %16 = tpu.matmul %14, %15, %cst {dimension_numbers = #tpu.dot_dimension_numbers<[1], [0], [0], [1], [0, 0, 1, 1], [], []>} : vector<8x12xbf16>, vector<12x16xbf16>, vector<8x16xf32> -> vector<8x16xf32>
    %c0_18 = arith.constant 0 : index
    %c0_19 = arith.constant 0 : index
    %17 = vector.load %arg4[%c0_18, %c0_19] : memref<8x1xf32, #tpu.memory_space<vmem>>, vector<8x1xf32>
    %18 = vector.broadcast %17 : vector<8x1xf32> to vector<8x16xf32>
    %19 = arith.addf %16, %18 : vector<8x16xf32>
    %cst_20 = arith.constant 0.000000e+00 : f32
    %20 = vector.broadcast %cst_20 : f32 to vector<8x16xf32>
    %21 = arith.maximumf %19, %20 : vector<8x16xf32>
    %22 = arith.truncf %21 : vector<8x16xf32> to vector<8x16xbf16>
    %c0_21 = arith.constant 0 : index
    %c0_22 = arith.constant 0 : index
    %23 = vector.load %arg11[%c0_21, %c0_22] : memref<8x4xbf16, #tpu.memory_space<vmem>>, vector<8x4xbf16>
    %c0_23 = arith.constant 0 : index
    %c0_24 = arith.constant 0 : index
    %24 = vector.load %arg13[%c0_23, %c0_24] : memref<24x16xbf16, #tpu.memory_space<vmem>>, vector<8x4xbf16>
    tpu.vector_store %arg13[%c0_23, %c0_24], %23 {strides = array<i32>} : memref<24x16xbf16, #tpu.memory_space<vmem>>, vector<8x4xbf16>,
    %25 = vector.extract_strided_slice %22 {offsets = [0, 0], sizes = [8, 12], strides = [1, 1]} : vector<8x16xbf16> to vector<8x12xbf16>
    %c0_25 = arith.constant 0 : index
    %c4_26 = arith.constant 4 : index
    %26 = vector.load %arg13[%c0_25, %c4_26] : memref<24x16xbf16, #tpu.memory_space<vmem>>, vector<8x12xbf16>
    tpu.vector_store %arg13[%c0_25, %c4_26], %25 {strides = array<i32>} : memref<24x16xbf16, #tpu.memory_space<vmem>>, vector<8x12xbf16>,
    %c0_27 = arith.constant 0 : index
    %c2_28 = arith.constant 2 : index
    %27 = vector.load %arg11[%c0_27, %c2_28] : memref<8x4xbf16, #tpu.memory_space<vmem>>, vector<8x2xbf16>
    %c8_29 = arith.constant 8 : index
    %c0_30 = arith.constant 0 : index
    %28 = vector.load %arg13[%c8_29, %c0_30] : memref<24x16xbf16, #tpu.memory_space<vmem>>, vector<8x2xbf16>
    tpu.vector_store %arg13[%c8_29, %c0_30], %27 {strides = array<i32>} : memref<24x16xbf16, #tpu.memory_space<vmem>>, vector<8x2xbf16>,
    %29 = vector.extract_strided_slice %22 {offsets = [0, 0], sizes = [8, 14], strides = [1, 1]} : vector<8x16xbf16> to vector<8x14xbf16>
    %c8_31 = arith.constant 8 : index
    %c2_32 = arith.constant 2 : index
    %30 = vector.load %arg13[%c8_31, %c2_32] : memref<24x16xbf16, #tpu.memory_space<vmem>>, vector<8x14xbf16>
    tpu.vector_store %arg13[%c8_31, %c2_32], %29 {strides = array<i32>} : memref<24x16xbf16, #tpu.memory_space<vmem>>, vector<8x14xbf16>,
    %c16 = arith.constant 16 : index
    %c0_33 = arith.constant 0 : index
    %31 = vector.load %arg13[%c16, %c0_33] : memref<24x16xbf16, #tpu.memory_space<vmem>>, vector<8x16xbf16>
    tpu.vector_store %arg13[%c16, %c0_33], %22 {strides = array<i32>} : memref<24x16xbf16, #tpu.memory_space<vmem>>, vector<8x16xbf16>,
    %c0_34 = arith.constant 0 : index
    %c0_35 = arith.constant 0 : index
    %32 = vector.load %arg5[%c0_34, %c0_35] : memref<8x24xbf16, #tpu.memory_space<vmem>>, vector<8x24xbf16>
    %c0_36 = arith.constant 0 : index
    %c0_37 = arith.constant 0 : index
    %33 = vector.load %arg13[%c0_36, %c0_37] : memref<24x16xbf16, #tpu.memory_space<vmem>>, vector<24x16xbf16>
    %cst_38 = arith.constant dense<0.000000e+00> : vector<8x16xf32>
    %34 = tpu.matmul %32, %33, %cst_38 {dimension_numbers = #tpu.dot_dimension_numbers<[1], [0], [0], [1], [0, 0, 1, 1], [], []>} : vector<8x24xbf16>, vector<24x16xbf16>, vector<8x16xf32> -> vector<8x16xf32>
    %c0_39 = arith.constant 0 : index
    %c0_40 = arith.constant 0 : index
    %35 = vector.load %arg6[%c0_39, %c0_40] : memref<8x1xf32, #tpu.memory_space<vmem>>, vector<8x1xf32>
    %36 = vector.broadcast %35 : vector<8x1xf32> to vector<8x16xf32>
    %37 = arith.addf %34, %36 : vector<8x16xf32>
    %cst_41 = arith.constant 0.000000e+00 : f32
    %38 = vector.broadcast %cst_41 : f32 to vector<8x16xf32>
    %39 = arith.maximumf %37, %38 : vector<8x16xf32>
    %c0_42 = arith.constant 0 : index
    %c0_43 = arith.constant 0 : index
    %40 = vector.load %arg7[%c0_42, %c0_43] : memref<8x4xbf16, #tpu.memory_space<vmem>>, vector<8x4xbf16>
    %cst_44 = arith.constant dense<0.000000e+00> : vector<8x16xf32>
    %41 = tpu.matmul %40, %4, %cst_44 {dimension_numbers = #tpu.dot_dimension_numbers<[1], [0], [0], [1], [0, 0, 1, 1], [], []>} : vector<8x4xbf16>, vector<4x16xbf16>, vector<8x16xf32> -> vector<8x16xf32>
    %c0_45 = arith.constant 0 : index
    %c0_46 = arith.constant 0 : index
    %42 = vector.load %arg8[%c0_45, %c0_46] : memref<8x1xf32, #tpu.memory_space<vmem>>, vector<8x1xf32>
    %43 = vector.broadcast %42 : vector<8x1xf32> to vector<8x16xf32>
    %44 = arith.addf %41, %43 : vector<8x16xf32>
    %45 = arith.addf %39, %44 : vector<8x16xf32>
    %cst_47 = arith.constant 0.000000e+00 : f32
    %46 = vector.broadcast %cst_47 : f32 to vector<8x16xf32>
    %47 = arith.maximumf %45, %46 : vector<8x16xf32>
    %48 = arith.truncf %47 : vector<8x16xf32> to vector<8x16xbf16>
    %c0_48 = arith.constant 0 : index
    %c0_49 = arith.constant 0 : index
    %c0_50 = arith.constant 0 : index
    %49 = vector.load %arg9[%c0_48, %c0_49, %c0_50] : memref<1x8x16xbf16, #tpu.memory_space<vmem>>, vector<1x8x16xbf16>
    %50 = vector.shape_cast %49 : vector<1x8x16xbf16> to vector<8x16xbf16>
    %51 = vector.shape_cast %48 : vector<8x16xbf16> to vector<1x8x16xbf16>
    tpu.vector_store %arg9[%c0_48, %c0_49, %c0_50], %51 {strides = array<i32>} : memref<1x8x16xbf16, #tpu.memory_space<vmem>>, vector<1x8x16xbf16>,
    return
  }
  func.func @transform_0(%arg0: i32, %arg1: i32) -> (i32, i32, i32) {
    %c0_i32 = arith.constant 0 : i32
    %c0_i32_0 = arith.constant 0 : i32
    return %arg0, %c0_i32, %arg1 : i32, i32, i32
  }
  func.func @transform_1(%arg0: i32, %arg1: i32) -> (i32, i32) {
    %c0_i32 = arith.constant 0 : i32
    %c0_i32_0 = arith.constant 0 : i32
    %c0_i32_1 = arith.constant 0 : i32
    return %c0_i32, %c0_i32_0 : i32, i32
  }
  func.func @transform_2(%arg0: i32, %arg1: i32) -> (i32, i32) {
    %c0_i32 = arith.constant 0 : i32
    %c0_i32_0 = arith.constant 0 : i32
    %c0_i32_1 = arith.constant 0 : i32
    return %c0_i32, %c0_i32_0 : i32, i32
  }
  func.func @transform_3(%arg0: i32, %arg1: i32) -> (i32, i32) {
    %c0_i32 = arith.constant 0 : i32
    %c0_i32_0 = arith.constant 0 : i32
    %c0_i32_1 = arith.constant 0 : i32
    return %c0_i32, %c0_i32_0 : i32, i32
  }
  func.func @transform_4(%arg0: i32, %arg1: i32) -> (i32, i32) {
    %c0_i32 = arith.constant 0 : i32
    %c0_i32_0 = arith.constant 0 : i32
    %c0_i32_1 = arith.constant 0 : i32
    return %c0_i32, %c0_i32_0 : i32, i32
  }
  func.func @transform_5(%arg0: i32, %arg1: i32) -> (i32, i32) {
    %c0_i32 = arith.constant 0 : i32
    %c0_i32_0 = arith.constant 0 : i32
    %c0_i32_1 = arith.constant 0 : i32
    return %c0_i32, %c0_i32_0 : i32, i32
  }
  func.func @transform_6(%arg0: i32, %arg1: i32) -> (i32, i32) {
    %c0_i32 = arith.constant 0 : i32
    %c0_i32_0 = arith.constant 0 : i32
    %c0_i32_1 = arith.constant 0 : i32
    return %c0_i32, %c0_i32_0 : i32, i32
  }
  func.func @transform_7(%arg0: i32, %arg1: i32) -> (i32, i32, i32) {
    %c0_i32 = arith.constant 0 : i32
    %c0_i32_0 = arith.constant 0 : i32
    return %arg0, %c0_i32, %arg1 : i32, i32, i32
  }
}

module attributes {stable_mosaic.version = 11 : i64} {
  func.func @_temporal_block_kernel(%arg0: i32, %arg1: i32, %arg2: memref<1x4x16xbf16, #tpu.memory_space<vmem>>, %arg3: memref<8x12xbf16, #tpu.memory_space<vmem>>, %arg4: memref<8x1xf32, #tpu.memory_space<vmem>>, %arg5: memref<8x24xbf16, #tpu.memory_space<vmem>>, %arg6: memref<8x1xf32, #tpu.memory_space<vmem>>, %arg7: memref<8x4xbf16, #tpu.memory_space<vmem>>, %arg8: memref<8x1xf32, #tpu.memory_space<vmem>>, %arg9: memref<1x8x16xbf16, #tpu.memory_space<vmem>>, %arg10: memref<4x4xbf16, #tpu.memory_space<vmem>>, %arg11: memref<8x4xbf16, #tpu.memory_space<vmem>>, %arg12: memref<12x16xbf16, #tpu.memory_space<vmem>>, %arg13: memref<24x16xbf16, #tpu.memory_space<vmem>>) attributes {dimension_semantics = [#tpu.dimension_semantics<parallel>, #tpu.dimension_semantics<arbitrary>], iteration_bounds = array<i64: 2, 1>, scalar_prefetch = 0 : i64, scratch_operands = 4 : i64, tpu.core_type = #tpu.core_type<tc>, window_params = [{transform_indices = @transform_0, window_bounds = array<i64: 1, 4, 16>}, {pipeline_mode = #tpu.pipeline_mode<synchronous>, transform_indices = @transform_1, window_bounds = array<i64: 8, 12>}, {pipeline_mode = #tpu.pipeline_mode<synchronous>, transform_indices = @transform_2, window_bounds = array<i64: 8, 1>}, {pipeline_mode = #tpu.pipeline_mode<synchronous>, transform_indices = @transform_3, window_bounds = array<i64: 8, 24>}, {pipeline_mode = #tpu.pipeline_mode<synchronous>, transform_indices = @transform_4, window_bounds = array<i64: 8, 1>}, {pipeline_mode = #tpu.pipeline_mode<synchronous>, transform_indices = @transform_5, window_bounds = array<i64: 8, 4>}, {pipeline_mode = #tpu.pipeline_mode<synchronous>, transform_indices = @transform_6, window_bounds = array<i64: 8, 1>}, {transform_indices = @transform_7, window_bounds = array<i64: 1, 8, 16>}]} {
    %c0_i32 = arith.constant 0 : i32
    %0 = arith.cmpi eq, %arg1, %c0_i32 : i32
    %1 = arith.extui %0 : i1 to i32
    %c0_i32_0 = arith.constant 0 : i32
    %2 = arith.cmpi ne, %1, %c0_i32_0 : i32
    scf.if %2 {
      %cst_51 = arith.constant 0.000000e+00 : bf16
      %52 = vector.broadcast %cst_51 : bf16 to vector<4x4xbf16>
      %c0_52 = arith.constant 0 : index
      %c0_53 = arith.constant 0 : index
      %53 = vector.load %arg10[%c0_52, %c0_53] : memref<4x4xbf16, #tpu.memory_space<vmem>>, vector<4x4xbf16>
      tpu.vector_store %arg10[%c0_52, %c0_53], %52 {strides = array<i32>} : memref<4x4xbf16, #tpu.memory_space<vmem>>, vector<4x4xbf16>,
      %cst_54 = arith.constant 0.000000e+00 : bf16
      %54 = vector.broadcast %cst_54 : bf16 to vector<8x4xbf16>
      %c0_55 = arith.constant 0 : index
      %c0_56 = arith.constant 0 : index
      %55 = vector.load %arg11[%c0_55, %c0_56] : memref<8x4xbf16, #tpu.memory_space<vmem>>, vector<8x4xbf16>
      tpu.vector_store %arg11[%c0_55, %c0_56], %54 {strides = array<i32>} : memref<8x4xbf16, #tpu.memory_space<vmem>>, vector<8x4xbf16>,
    } else {
    }
    %c0 = arith.constant 0 : index
    %c0_1 = arith.constant 0 : index
    %c0_2 = arith.constant 0 : index
    %3 = vector.load %arg2[%c0, %c0_1, %c0_2] : memref<1x4x16xbf16, #tpu.memory_space<vmem>>, vector<1x4x16xbf16>
    %4 = vector.shape_cast %3 : vector<1x4x16xbf16> to vector<4x16xbf16>
    %c0_3 = arith.constant 0 : index
    %c0_4 = arith.constant 0 : index
    %5 = vector.load %arg10[%c0_3, %c0_4] : memref<4x4xbf16, #tpu.memory_space<vmem>>, vector<4x4xbf16>
    %c0_5 = arith.constant 0 : index
    %c0_6 = arith.constant 0 : index
    %6 = vector.load %arg12[%c0_5, %c0_6] : memref<12x16xbf16, #tpu.memory_space<vmem>>, vector<4x4xbf16>
    tpu.vector_store %arg12[%c0_5, %c0_6], %5 {strides = array<i32>} : memref<12x16xbf16, #tpu.memory_space<vmem>>, vector<4x4xbf16>,
    %7 = vector.extract_strided_slice %4 {offsets = [0, 0], sizes = [4, 12], strides = [1, 1]} : vector<4x16xbf16> to vector<4x12xbf16>
    %c0_7 = arith.constant 0 : index
    %c4 = arith.constant 4 : index
    %8 = vector.load %arg12[%c0_7, %c4] : memref<12x16xbf16, #tpu.memory_space<vmem>>, vector<4x12xbf16>
    tpu.vector_store %arg12[%c0_7, %c4], %7 {strides = array<i32>} : memref<12x16xbf16, #tpu.memory_space<vmem>>, vector<4x12xbf16>,
    %c0_8 = arith.constant 0 : index
    %c2 = arith.constant 2 : index
    %9 = vector.load %arg10[%c0_8, %c2] : memref<4x4xbf16, #tpu.memory_space<vmem>>, vector<4x2xbf16>
    %c4_9 = arith.constant 4 : index
    %c0_10 = arith.constant 0 : index
    %10 = vector.load %arg12[%c4_9, %c0_10] : memref<12x16xbf16, #tpu.memory_space<vmem>>, vector<4x2xbf16>
    tpu.vector_store %arg12[%c4_9, %c0_10], %9 {strides = array<i32>} : memref<12x16xbf16, #tpu.memory_space<vmem>>, vector<4x2xbf16>,
    %11 = vector.extract_strided_slice %4 {offsets = [0, 0], sizes = [4, 14], strides = [1, 1]} : vector<4x16xbf16> to vector<4x14xbf16>
    %c4_11 = arith.constant 4 : index
    %c2_12 = arith.constant 2 : index
    %12 = vector.load %arg12[%c4_11, %c2_12] : memref<12x16xbf16, #tpu.memory_space<vmem>>, vector<4x14xbf16>
    tpu.vector_store %arg12[%c4_11, %c2_12], %11 {strides = array<i32>} : memref<12x16xbf16, #tpu.memory_space<vmem>>, vector<4x14xbf16>,
    %c8 = arith.constant 8 : index
    %c0_13 = arith.constant 0 : index
    %13 = vector.load %arg12[%c8, %c0_13] : memref<12x16xbf16, #tpu.memory_space<vmem>>, vector<4x16xbf16>
    tpu.vector_store %arg12[%c8, %c0_13], %4 {strides = array<i32>} : memref<12x16xbf16, #tpu.memory_space<vmem>>, vector<4x16xbf16>,
    %c0_14 = arith.constant 0 : index
    %c0_15 = arith.constant 0 : index
    %14 = vector.load %arg3[%c0_14, %c0_15] : memref<8x12xbf16, #tpu.memory_space<vmem>>, vector<8x12xbf16>
    %c0_16 = arith.constant 0 : index
    %c0_17 = arith.constant 0 : index
    %15 = vector.load %arg12[%c0_16, %c0_17] : memref<12x16xbf16, #tpu.memory_space<vmem>>, vector<12x16xbf16>
    %cst = arith.constant dense<0.000000e+00> : vector<8x16xf32>
    %16 = tpu.matmul %14, %15, %cst {dimension_numbers = #tpu.dot_dimension_numbers<[1], [0], [0], [1], [0, 0, 1, 1], [], []>} : vector<8x12xbf16>, vector<12x16xbf16>, vector<8x16xf32> -> vector<8x16xf32>
    %c0_18 = arith.constant 0 : index
    %c0_19 = arith.constant 0 : index
    %17 = vector.load %arg4[%c0_18, %c0_19] : memref<8x1xf32, #tpu.memory_space<vmem>>, vector<8x1xf32>
    %18 = vector.broadcast %17 : vector<8x1xf32> to vector<8x16xf32>
    %19 = arith.addf %16, %18 : vector<8x16xf32>
    %cst_20 = arith.constant 0.000000e+00 : f32
    %20 = vector.broadcast %cst_20 : f32 to vector<8x16xf32>
    %21 = arith.maximumf %19, %20 : vector<8x16xf32>
    %22 = arith.truncf %21 : vector<8x16xf32> to vector<8x16xbf16>
    %c0_21 = arith.constant 0 : index
    %c0_22 = arith.constant 0 : index
    %23 = vector.load %arg11[%c0_21, %c0_22] : memref<8x4xbf16, #tpu.memory_space<vmem>>, vector<8x4xbf16>
    %c0_23 = arith.constant 0 : index
    %c0_24 = arith.constant 0 : index
    %24 = vector.load %arg13[%c0_23, %c0_24] : memref<24x16xbf16, #tpu.memory_space<vmem>>, vector<8x4xbf16>
    tpu.vector_store %arg13[%c0_23, %c0_24], %23 {strides = array<i32>} : memref<24x16xbf16, #tpu.memory_space<vmem>>, vector<8x4xbf16>,
    %25 = vector.extract_strided_slice %22 {offsets = [0, 0], sizes = [8, 12], strides = [1, 1]} : vector<8x16xbf16> to vector<8x12xbf16>
    %c0_25 = arith.constant 0 : index
    %c4_26 = arith.constant 4 : index
    %26 = vector.load %arg13[%c0_25, %c4_26] : memref<24x16xbf16, #tpu.memory_space<vmem>>, vector<8x12xbf16>
    tpu.vector_store %arg13[%c0_25, %c4_26], %25 {strides = array<i32>} : memref<24x16xbf16, #tpu.memory_space<vmem>>, vector<8x12xbf16>,
    %c0_27 = arith.constant 0 : index
    %c2_28 = arith.constant 2 : index
    %27 = vector.load %arg11[%c0_27, %c2_28] : memref<8x4xbf16, #tpu.memory_space<vmem>>, vector<8x2xbf16>
    %c8_29 = arith.constant 8 : index
    %c0_30 = arith.constant 0 : index
    %28 = vector.load %arg13[%c8_29, %c0_30] : memref<24x16xbf16, #tpu.memory_space<vmem>>, vector<8x2xbf16>
    tpu.vector_store %arg13[%c8_29, %c0_30], %27 {strides = array<i32>} : memref<24x16xbf16, #tpu.memory_space<vmem>>, vector<8x2xbf16>,
    %29 = vector.extract_strided_slice %22 {offsets = [0, 0], sizes = [8, 14], strides = [1, 1]} : vector<8x16xbf16> to vector<8x14xbf16>
    %c8_31 = arith.constant 8 : index
    %c2_32 = arith.constant 2 : index
    %30 = vector.load %arg13[%c8_31, %c2_32] : memref<24x16xbf16, #tpu.memory_space<vmem>>, vector<8x14xbf16>
    tpu.vector_store %arg13[%c8_31, %c2_32], %29 {strides = array<i32>} : memref<24x16xbf16, #tpu.memory_space<vmem>>, vector<8x14xbf16>,
    %c16 = arith.constant 16 : index
    %c0_33 = arith.constant 0 : index
    %31 = vector.load %arg13[%c16, %c0_33] : memref<24x16xbf16, #tpu.memory_space<vmem>>, vector<8x16xbf16>
    tpu.vector_store %arg13[%c16, %c0_33], %22 {strides = array<i32>} : memref<24x16xbf16, #tpu.memory_space<vmem>>, vector<8x16xbf16>,
    %c0_34 = arith.constant 0 : index
    %c0_35 = arith.constant 0 : index
    %32 = vector.load %arg5[%c0_34, %c0_35] : memref<8x24xbf16, #tpu.memory_space<vmem>>, vector<8x24xbf16>
    %c0_36 = arith.constant 0 : index
    %c0_37 = arith.constant 0 : index
    %33 = vector.load %arg13[%c0_36, %c0_37] : memref<24x16xbf16, #tpu.memory_space<vmem>>, vector<24x16xbf16>
    %cst_38 = arith.constant dense<0.000000e+00> : vector<8x16xf32>
    %34 = tpu.matmul %32, %33, %cst_38 {dimension_numbers = #tpu.dot_dimension_numbers<[1], [0], [0], [1], [0, 0, 1, 1], [], []>} : vector<8x24xbf16>, vector<24x16xbf16>, vector<8x16xf32> -> vector<8x16xf32>
    %c0_39 = arith.constant 0 : index
    %c0_40 = arith.constant 0 : index
    %35 = vector.load %arg6[%c0_39, %c0_40] : memref<8x1xf32, #tpu.memory_space<vmem>>, vector<8x1xf32>
    %36 = vector.broadcast %35 : vector<8x1xf32> to vector<8x16xf32>
    %37 = arith.addf %34, %36 : vector<8x16xf32>
    %cst_41 = arith.constant 0.000000e+00 : f32
    %38 = vector.broadcast %cst_41 : f32 to vector<8x16xf32>
    %39 = arith.maximumf %37, %38 : vector<8x16xf32>
    %c0_42 = arith.constant 0 : index
    %c0_43 = arith.constant 0 : index
    %40 = vector.load %arg7[%c0_42, %c0_43] : memref<8x4xbf16, #tpu.memory_space<vmem>>, vector<8x4xbf16>
    %cst_44 = arith.constant dense<0.000000e+00> : vector<8x16xf32>
    %41 = tpu.matmul %40, %4, %cst_44 {dimension_numbers = #tpu.dot_dimension_numbers<[1], [0], [0], [1], [0, 0, 1, 1], [], []>} : vector<8x4xbf16>, vector<4x16xbf16>, vector<8x16xf32> -> vector<8x16xf32>
    %c0_45 = arith.constant 0 : index
    %c0_46 = arith.constant 0 : index
    %42 = vector.load %arg8[%c0_45, %c0_46] : memref<8x1xf32, #tpu.memory_space<vmem>>, vector<8x1xf32>
    %43 = vector.broadcast %42 : vector<8x1xf32> to vector<8x16xf32>
    %44 = arith.addf %41, %43 : vector<8x16xf32>
    %45 = arith.addf %39, %44 : vector<8x16xf32>
    %cst_47 = arith.constant 0.000000e+00 : f32
    %46 = vector.broadcast %cst_47 : f32 to vector<8x16xf32>
    %47 = arith.maximumf %45, %46 : vector<8x16xf32>
    %48 = arith.truncf %47 : vector<8x16xf32> to vector<8x16xbf16>
    %c0_48 = arith.constant 0 : index
    %c0_49 = arith.constant 0 : index
    %c0_50 = arith.constant 0 : index
    %49 = vector.load %arg9[%c0_48, %c0_49, %c0_50] : memref<1x8x16xbf16, #tpu.memory_space<vmem>>, vector<1x8x16xbf16>
    %50 = vector.shape_cast %49 : vector<1x8x16xbf16> to vector<8x16xbf16>
    %51 = vector.shape_cast %48 : vector<8x16xbf16> to vector<1x8x16xbf16>
    tpu.vector_store %arg9[%c0_48, %c0_49, %c0_50], %51 {strides = array<i32>} : memref<1x8x16xbf16, #tpu.memory_space<vmem>>, vector<1x8x16xbf16>,
    return
  }
  func.func @transform_0(%arg0: i32, %arg1: i32) -> (i32, i32, i32) {
    %c0_i32 = arith.constant 0 : i32
    %c0_i32_0 = arith.constant 0 : i32
    return %arg0, %c0_i32, %arg1 : i32, i32, i32
  }
  func.func @transform_1(%arg0: i32, %arg1: i32) -> (i32, i32) {
    %c0_i32 = arith.constant 0 : i32
    %c0_i32_0 = arith.constant 0 : i32
    %c0_i32_1 = arith.constant 0 : i32
    return %c0_i32, %c0_i32_0 : i32, i32
  }
  func.func @transform_2(%arg0: i32, %arg1: i32) -> (i32, i32) {
    %c0_i32 = arith.constant 0 : i32
    %c0_i32_0 = arith.constant 0 : i32
    %c0_i32_1 = arith.constant 0 : i32
    return %c0_i32, %c0_i32_0 : i32, i32
  }
  func.func @transform_3(%arg0: i32, %arg1: i32) -> (i32, i32) {
    %c0_i32 = arith.constant 0 : i32
    %c0_i32_0 = arith.constant 0 : i32
    %c0_i32_1 = arith.constant 0 : i32
    return %c0_i32, %c0_i32_0 : i32, i32
  }
  func.func @transform_4(%arg0: i32, %arg1: i32) -> (i32, i32) {
    %c0_i32 = arith.constant 0 : i32
    %c0_i32_0 = arith.constant 0 : i32
    %c0_i32_1 = arith.constant 0 : i32
    return %c0_i32, %c0_i32_0 : i32, i32
  }
  func.func @transform_5(%arg0: i32, %arg1: i32) -> (i32, i32) {
    %c0_i32 = arith.constant 0 : i32
    %c0_i32_0 = arith.constant 0 : i32
    %c0_i32_1 = arith.constant 0 : i32
    return %c0_i32, %c0_i32_0 : i32, i32
  }
  func.func @transform_6(%arg0: i32, %arg1: i32) -> (i32, i32) {
    %c0_i32 = arith.constant 0 : i32
    %c0_i32_0 = arith.constant 0 : i32
    %c0_i32_1 = arith.constant 0 : i32
    return %c0_i32, %c0_i32_0 : i32, i32
  }
  func.func @transform_7(%arg0: i32, %arg1: i32) -> (i32, i32, i32) {
    %c0_i32 = arith.constant 0 : i32
    %c0_i32_0 = arith.constant 0 : i32
    return %arg0, %c0_i32, %arg1 : i32, i32, i32
  }
}

</mosaic_0001>

<llo_original>
// kernel: tpu_custom_call.1
$region0: #{tpu_custom_call.1}
  #allocation0 [shape = 'u32[]', space=smem, size = 0x4, offset = 0x4, fixed_abs, tag = 'smem constant byte address 0x4 - core index']
  #allocation1 [shape = 'u32[144,128]{1,0:T(1,128)}', space=vmem, size = 0x12000, scoped, tag = 'internal scratch']
  #allocation2 [shape = 'bf16[4,4]{1,0:T(4,128)(2,1)}', space=vmem, size = 0x400, scoped, tag = 'scratch operand']
  #allocation3 [shape = 'bf16[8,4]{1,0:T(8,128)(2,1)}', space=vmem, size = 0x800, scoped, tag = 'scratch operand']
  #allocation4 [shape = 'bf16[12,16]{1,0:T(8,128)(2,1)}', space=vmem, size = 0x1000, scoped, tag = 'scratch operand']
  #allocation5 [shape = 'bf16[24,16]{1,0:T(8,128)(2,1)}', space=vmem, size = 0x1800, scoped, tag = 'scratch operand']
  %s0 = inlined_call_operand.vmem [shape: bf16[2,4,16], index: 0, kind: input, shape index: {}]
  %s1 = inlined_call_operand.vmem [shape: bf16[8,12], index: 1, kind: input, shape index: {}]
  %s2 = inlined_call_operand.vmem [shape: f32[8,1], index: 2, kind: input, shape index: {}]
  %s3 = inlined_call_operand.vmem [shape: bf16[8,24], index: 3, kind: input, shape index: {}]
  %s4 = inlined_call_operand.vmem [shape: f32[8,1], index: 4, kind: input, shape index: {}]
  %s5 = inlined_call_operand.vmem [shape: bf16[8,4], index: 5, kind: input, shape index: {}]
  %s6 = inlined_call_operand.vmem [shape: f32[8,1], index: 6, kind: input, shape index: {}]
  %s7 = inlined_call_operand.hbm [shape: bf16[2,8,16], index: 7, kind: output, shape index: {}]
  %s8 = sld [smem:[#allocation0]]
  $region65: #{tpu_custom_call.1} parent=0
    _
  %s10 = ssub.s32 1, %s8
  %s11 = scalar_select 0, %s10, %s8
  $region1: #{tpu_custom_call.1} parent=0
    #allocation6 [shape = 'u8[4096]{0}', space=vmem, size = 0x1000, scoped, tag = 'output window, operand 0']
    #allocation7 [shape = 's32[2]{0}', space=sflag, size = 0x8, scoped, tag = 'scoped memory for tpu_custom_call.1']
    %12 = vsyncpa [#allocation7], 0
    %s13 = scalar_lea.sflag [#allocation7], 1
    %14 = vsyncpa %s13, 0
    loop: start=0, step=1, limit=4
    $region2: #{tpu_custom_call.1} parent=1 // loop_pre_header
      _
    $region3: #{tpu_custom_call.1} parent=1 // loop_header
      %s16 = sphi 0, %s20
      %p17 = scmp.ge.s32.totalorder %s16, 4
      %s23 = sphi 0, %s35
      %s24 = sphi 0, %s31
      %s25 = sphi 0, %s23
      %s26 = sphi 0, %s24
      %s27 = sphi 0, %s25
      %s28 = sphi 0, %s26
      %s40 = sphi 0, %s42
      %s43 = sphi 0, %s40
      %s44 = sphi 0, %s43
      %s60 = sphi 0, %s44
      %s64 = sphi 0, %s64
      %s66 = sphi 0, %s64
      %s67 = sphi 0, %s66
      %s81 = sphi 0, %s67
      %s85 = sphi 0, %s85
      %s87 = sphi 0, %s85
      %s88 = sphi 0, %s87
      %s102 = sphi 0, %s88
      %s106 = sphi 0, %s106
      %s108 = sphi 0, %s106
      %s109 = sphi 0, %s108
      %s123 = sphi 0, %s109
      %s127 = sphi 0, %s127
      %s129 = sphi 0, %s127
      %s130 = sphi 0, %s129
      %s144 = sphi 0, %s130
      %s148 = sphi 0, %s148
      %s150 = sphi 0, %s148
      %s151 = sphi 0, %s150
      %s165 = sphi 0, %s151
      %s169 = sphi 0, %s169
      %s171 = sphi 0, %s169
      %s172 = sphi 0, %s171
      %s186 = sphi 0, %s172
      %s194 = sphi 0, %s196
      %s197 = sphi 0, %s194
      %s198 = sphi 0, %s197
      %s214 = sphi 0, %s198
    $region4: #{tpu_custom_call.1} parent=1 // loop_header_branch
      %19 = sbr.rel (%p17) target = $region8
    $region5: #{tpu_custom_call.1} parent=1 // loop_body
      %s21 = ssub.s32 %s16, 1
      %s22 = ssub.s32 %s16, 2
      %s29 = sadd.s32 1, %s24
      %p30 = scmp.ge.s32.totalorder %s29, 1
      %s31 = scalar_select %p30, 0, %s29
      %s32 = sadd.s32 1, %s23
      %s33 = scalar_select %p30, %s32, %s23
      %p34 = scmp.ge.s32.totalorder %s33, 2
      %s35 = scalar_select %p34, 0, %s33
      %s36 = ssub.s32 %s23, %s35
      %s37 = ssub.s32 %s24, %s31
      %s38 = sor.u32 %s36, %s37
      %p39 = scmp.eq.s32.totalorder %s38, 0
      %s41 = sadd.s32 %s40, 1
      %s42 = scalar_select %p39, %s40, %s41
      %p45 = pneg %p39
      %p46 = scmp.eq.s32.totalorder %s16, 1
      %p47 = por %p45, %p46
      %p48 = scmp.ne.s32.totalorder %s40, %s43
      %p49 = scmp.eq.s32.totalorder %s16, 0
      %p50 = por %p48, %p49
      %p51 = scmp.ne.s32.totalorder %s40, %s43
      %p52 = scmp.eq.s32.totalorder %s21, 1
      %p53 = por %p51, %p52
      %p54 = scmp.ne.s32.totalorder %s43, %s44
      %p55 = scmp.eq.s32.totalorder %s21, 0
      %p56 = por %p54, %p55
      %p57 = scmp.ne.s32.totalorder %s43, %s44
      %p58 = scmp.eq.s32.totalorder %s22, 1
      %p59 = por %p57, %p58
      %p61 = scmp.ne.s32.totalorder %s44, %s60
      %p62 = scmp.eq.s32.totalorder %s22, 0
      %p63 = por %p61, %p62
      %s65 = sadd.s32 %s64, 1
      %p68 = scmp.eq.s32.totalorder %s16, 1
      %p69 = scmp.ne.s32.totalorder %s64, %s66
      %p70 = scmp.eq.s32.totalorder %s16, 0
      %p71 = por %p69, %p70
      %p72 = scmp.ne.s32.totalorder %s64, %s66
      %p73 = scmp.eq.s32.totalorder %s21, 1
      %p74 = por %p72, %p73
      %p75 = scmp.ne.s32.totalorder %s66, %s67
      %p76 = scmp.eq.s32.totalorder %s21, 0
      %p77 = por %p75, %p76
      %p78 = scmp.ne.s32.totalorder %s66, %s67
      %p79 = scmp.eq.s32.totalorder %s22, 1
      %p80 = por %p78, %p79
      %p82 = scmp.ne.s32.totalorder %s67, %s81
      %p83 = scmp.eq.s32.totalorder %s22, 0
      %p84 = por %p82, %p83
      %s86 = sadd.s32 %s85, 1
      %p89 = scmp.eq.s32.totalorder %s16, 1
      %p90 = scmp.ne.s32.totalorder %s85, %s87
      %p91 = scmp.eq.s32.totalorder %s16, 0
      %p92 = por %p90, %p91
      %p93 = scmp.ne.s32.totalorder %s85, %s87
      %p94 = scmp.eq.s32.totalorder %s21, 1
      %p95 = por %p93, %p94
      %p96 = scmp.ne.s32.totalorder %s87, %s88
      %p97 = scmp.eq.s32.totalorder %s21, 0
      %p98 = por %p96, %p97
      %p99 = scmp.ne.s32.totalorder %s87, %s88
      %p100 = scmp.eq.s32.totalorder %s22, 1
      %p101 = por %p99, %p100
      %p103 = scmp.ne.s32.totalorder %s88, %s102
      %p104 = scmp.eq.s32.totalorder %s22, 0
      %p105 = por %p103, %p104
      %s107 = sadd.s32 %s106, 1
      %p110 = scmp.eq.s32.totalorder %s16, 1
      %p111 = scmp.ne.s32.totalorder %s106, %s108
      %p112 = scmp.eq.s32.totalorder %s16, 0
      %p113 = por %p111, %p112
      %p114 = scmp.ne.s32.totalorder %s106, %s108
      %p115 = scmp.eq.s32.totalorder %s21, 1
      %p116 = por %p114, %p115
      %p117 = scmp.ne.s32.totalorder %s108, %s109
      %p118 = scmp.eq.s32.totalorder %s21, 0
      %p119 = por %p117, %p118
      %p120 = scmp.ne.s32.totalorder %s108, %s109
      %p121 = scmp.eq.s32.totalorder %s22, 1
      %p122 = por %p120, %p121
      %p124 = scmp.ne.s32.totalorder %s109, %s123
      %p125 = scmp.eq.s32.totalorder %s22, 0
      %p126 = por %p124, %p125
      %s128 = sadd.s32 %s127, 1
      %p131 = scmp.eq.s32.totalorder %s16, 1
      %p132 = scmp.ne.s32.totalorder %s127, %s129
      %p133 = scmp.eq.s32.totalorder %s16, 0
      %p134 = por %p132, %p133
      %p135 = scmp.ne.s32.totalorder %s127, %s129
      %p136 = scmp.eq.s32.totalorder %s21, 1
      %p137 = por %p135, %p136
      %p138 = scmp.ne.s32.totalorder %s129, %s130
      %p139 = scmp.eq.s32.totalorder %s21, 0
      %p140 = por %p138, %p139
      %p141 = scmp.ne.s32.totalorder %s129, %s130
      %p142 = scmp.eq.s32.totalorder %s22, 1
      %p143 = por %p141, %p142
      %p145 = scmp.ne.s32.totalorder %s130, %s144
      %p146 = scmp.eq.s32.totalorder %s22, 0
      %p147 = por %p145, %p146
      %s149 = sadd.s32 %s148, 1
      %p152 = scmp.eq.s32.totalorder %s16, 1
      %p153 = scmp.ne.s32.totalorder %s148, %s150
      %p154 = scmp.eq.s32.totalorder %s16, 0
      %p155 = por %p153, %p154
      %p156 = scmp.ne.s32.totalorder %s148, %s150
      %p157 = scmp.eq.s32.totalorder %s21, 1
      %p158 = por %p156, %p157
      %p159 = scmp.ne.s32.totalorder %s150, %s151
      %p160 = scmp.eq.s32.totalorder %s21, 0
      %p161 = por %p159, %p160
      %p162 = scmp.ne.s32.totalorder %s150, %s151
      %p163 = scmp.eq.s32.totalorder %s22, 1
      %p164 = por %p162, %p163
      %p166 = scmp.ne.s32.totalorder %s151, %s165
      %p167 = scmp.eq.s32.totalorder %s22, 0
      %p168 = por %p166, %p167
      %s170 = sadd.s32 %s169, 1
      %p173 = scmp.eq.s32.totalorder %s16, 1
      %p174 = scmp.ne.s32.totalorder %s169, %s171
      %p175 = scmp.eq.s32.totalorder %s16, 0
      %p176 = por %p174, %p175
      %p177 = scmp.ne.s32.totalorder %s169, %s171
      %p178 = scmp.eq.s32.totalorder %s21, 1
      %p179 = por %p177, %p178
      %p180 = scmp.ne.s32.totalorder %s171, %s172
      %p181 = scmp.eq.s32.totalorder %s21, 0
      %p182 = por %p180, %p181
      %p183 = scmp.ne.s32.totalorder %s171, %s172
      %p184 = scmp.eq.s32.totalorder %s22, 1
      %p185 = por %p183, %p184
      %p187 = scmp.ne.s32.totalorder %s172, %s186
      %p188 = scmp.eq.s32.totalorder %s22, 0
      %p189 = por %p187, %p188
      %s190 = ssub.s32 %s23, %s35
      %s191 = ssub.s32 %s24, %s31
      %s192 = sor.u32 %s190, %s191
      %p193 = scmp.eq.s32.totalorder %s192, 0
      %s195 = sadd.s32 %s194, 1
      %s196 = scalar_select %p193, %s194, %s195
      %p199 = pneg %p193
      %p200 = scmp.eq.s32.totalorder %s16, 1
      %p201 = por %p199, %p200
      %p202 = scmp.ne.s32.totalorder %s194, %s197
      %p203 = scmp.eq.s32.totalorder %s16, 0
      %p204 = por %p202, %p203
      %p205 = scmp.ne.s32.totalorder %s194, %s197
      %p206 = scmp.eq.s32.totalorder %s21, 1
      %p207 = por %p205, %p206
      %p208 = scmp.ne.s32.totalorder %s197, %s198
      %p209 = scmp.eq.s32.totalorder %s21, 0
      %p210 = por %p208, %p209
      %p211 = scmp.ne.s32.totalorder %s197, %s198
      %p212 = scmp.eq.s32.totalorder %s22, 1
      %p213 = por %p211, %p212
      %p215 = scmp.ne.s32.totalorder %s198, %s214
      %p216 = scmp.eq.s32.totalorder %s22, 0
      %p217 = por %p215, %p216
      %p218 = scmp.le.s32.totalorder 1, %s16
      %p219 = scmp.lt.s32.totalorder %s16, 3
      %p220 = pnand %p218, %p219
      %p221 = pneg %p220
      // Predicated region
      $region9: #{tpu_custom_call.1} parent=5 // pred_check
        _
      $region10: #{tpu_custom_call.1} parent=5 // pred_check_branch
        %223 = sbr.rel (%p220) target = $region12
      $region11: #{tpu_custom_call.1} parent=5 // pred_region
        %s224 = ssub.s32 %s16, 1
        // Predicated region
        $region13: #{tpu_custom_call.1} parent=11 // pred_check
          %p225 = pneg %p77
        $region14: #{tpu_custom_call.1} parent=11 // pred_check_branch
          %227 = sbr.rel (%p225) target = $region16
        $region15: #{tpu_custom_call.1} parent=11 // pred_region
          _
        $region16: #{tpu_custom_call.1} parent=11 // pred_fallthru
          _
        // Predicated region
        $region17: #{tpu_custom_call.1} parent=11 // pred_check
          %p228 = pneg %p98
        $region18: #{tpu_custom_call.1} parent=11 // pred_check_branch
          %230 = sbr.rel (%p228) target = $region20
        $region19: #{tpu_custom_call.1} parent=11 // pred_region
          _
        $region20: #{tpu_custom_call.1} parent=11 // pred_fallthru
          _
        // Predicated region
        $region21: #{tpu_custom_call.1} parent=11 // pred_check
          %p231 = pneg %p119
        $region22: #{tpu_custom_call.1} parent=11 // pred_check_branch
          %233 = sbr.rel (%p231) target = $region24
        $region23: #{tpu_custom_call.1} parent=11 // pred_region
          _
        $region24: #{tpu_custom_call.1} parent=11 // pred_fallthru
          _
        // Predicated region
        $region25: #{tpu_custom_call.1} parent=11 // pred_check
          %p234 = pneg %p140
        $region26: #{tpu_custom_call.1} parent=11 // pred_check_branch
          %236 = sbr.rel (%p234) target = $region28
        $region27: #{tpu_custom_call.1} parent=11 // pred_region
          _
        $region28: #{tpu_custom_call.1} parent=11 // pred_fallthru
          _
        // Predicated region
        $region29: #{tpu_custom_call.1} parent=11 // pred_check
          %p237 = pneg %p161
        $region30: #{tpu_custom_call.1} parent=11 // pred_check_branch
          %239 = sbr.rel (%p237) target = $region32
        $region31: #{tpu_custom_call.1} parent=11 // pred_region
          _
        $region32: #{tpu_custom_call.1} parent=11 // pred_fallthru
          _
        // Predicated region
        $region33: #{tpu_custom_call.1} parent=11 // pred_check
          %p240 = pneg %p182
        $region34: #{tpu_custom_call.1} parent=11 // pred_check_branch
          %242 = sbr.rel (%p240) target = $region36
        $region35: #{tpu_custom_call.1} parent=11 // pred_region
          _
        $region36: #{tpu_custom_call.1} parent=11 // pred_fallthru
          _
      $region12: #{tpu_custom_call.1} parent=5 // pred_fallthru
        _
      %p243 = scmp.lt.s32.totalorder %s16, 2
      // Predicated region
      $region37: #{tpu_custom_call.1} parent=5 // pred_check
        %p244 = pneg %p243
      $region38: #{tpu_custom_call.1} parent=5 // pred_check_branch
        %246 = sbr.rel (%p244) target = $region40
      $region39: #{tpu_custom_call.1} parent=5 // pred_region
        // Predicated region
        $region41: #{tpu_custom_call.1} parent=39 // pred_check
          %p247 = pneg %p50
        $region42: #{tpu_custom_call.1} parent=39 // pred_check_branch
          %249 = sbr.rel (%p247) target = $region44
        $region43: #{tpu_custom_call.1} parent=39 // pred_region
          %p250 = scmp.lt.s32.totalorder %s23, 1
          %s251 = scalar_select %p250, %s23, 1
          %p252 = scmp.lt.s32.totalorder %s24, 0
          %s253 = scalar_select %p252, %s24, 0
          %s254 = sadd.s32 %s253, %s251
          %s255 = smul.addr %s254, 2
          %s256 = scalar_lea.vmem %s0, %s255
        $region44: #{tpu_custom_call.1} parent=39 // pred_fallthru
          _
      $region40: #{tpu_custom_call.1} parent=5 // pred_fallthru
        _
      %p257 = scmp.le.s32.totalorder 1, %s16
      %p258 = scmp.lt.s32.totalorder %s16, 3
      %p259 = pnand %p257, %p258
      %p260 = pneg %p259
      // Predicated region
      $region45: #{tpu_custom_call.1} parent=5 // pred_check
        _
      $region46: #{tpu_custom_call.1} parent=5 // pred_check_branch
        %262 = sbr.rel (%p259) target = $region48
      $region47: #{tpu_custom_call.1} parent=5 // pred_region
        %s263 = ssub.s32 %s16, 1
        %p264 = scmp.lt.s32.totalorder %s25, 1
        %s265 = scalar_select %p264, %s25, 1
        %p266 = scmp.lt.s32.totalorder %s26, 0
        %s267 = scalar_select %p266, %s26, 0
        %s268 = sadd.s32 %s267, %s265
        %s269 = smul.addr %s268, 2
        %s270 = scalar_lea.vmem %s0, %s269
        %p271 = pneg %p56
        %p272 = pneg %p53
        %p273 = pneg %p77
        %p274 = pneg %p74
        %p275 = pneg %p98
        %p276 = pneg %p95
        %p277 = pneg %p119
        %p278 = pneg %p116
        %p279 = pneg %p140
        %p280 = pneg %p137
        %p281 = pneg %p161
        %p282 = pneg %p158
        %p283 = pneg %p182
        %p284 = pneg %p179
        %p285 = pneg %p210
        %p286 = pneg %p207
        %s287 = sand.u32 %s197, 1
        %s288 = scalar_lea.sflag [#allocation7], %s287
        %s289 = sand.u32 %s197, 1
        %s290 = smul.addr %s289, 4
        %s291 = scalar_lea.vmem [#allocation6], %s290
        %p292 = scmp.lt.s32.totalorder %s25, 1
        %s293 = scalar_select %p292, %s25, 1
        %p294 = scmp.lt.s32.totalorder %s26, 0
        %s295 = scalar_select %p294, %s26, 0
        %s296 = sadd.s32 %s295, %s293
        %s297 = smul.addr %s296, 2
        %s298 = scalar_lea.vmem %s0, %s297
        %p300 = scmp.eq.s32.totalorder %s26, 0
        // Predicated region
        $region49: #{tpu_custom_call.1} parent=47 // pred_check
          %p301 = pneg %p300
        $region50: #{tpu_custom_call.1} parent=47 // pred_check_branch
          %303 = sbr.rel (%p301) target = $region52
        $region51: #{tpu_custom_call.1} parent=47 // pred_region
          %vm304 = vcmask 25600
          %305 = vst.msk [vmem:[#allocation2] sm:$0x3] %vm304, 0
          %vm306 = vcmask 27648
          %307 = vst.msk [vmem:[#allocation3] sm:$0xf] %vm306, 0
        $region52: #{tpu_custom_call.1} parent=47 // pred_fallthru
          _
        %v308 = vld [vmem:[%s298] sm:$0x3]
        %v309 = vld [vmem:[#allocation2] sm:$0x3]
        %vm310 = vcmask 25600
        %311 = vst.msk [vmem:[#allocation4] sm:$0x3] %vm310, %v309
        %v314 = vunpack.c.l.s4 1983009808
        %v315 = vunpack.c.0.s8 %v314
        %v316 = vlaneseq
        %v317 = vshrl.u32 %v316, 7
        %v318 = vsub.s32 %v315, %v317
        %v319 = vrot.slane %v308, %v318
        %320 = vrot.lane.b32.xlu0 %v319, 4
        %v321 = vpop.permute.xlu0 %320
        %vm323 = vcmask 123936
        %324 = vst.msk [vmem:[#allocation4] sm:$0x3] %vm323, %v321
        %v325 = vld [vmem:[#allocation2] sm:$0x3]
        %v327 = vcombine.low %v325, %v325
        %v329 = vunpack.c.l.s4 1983009808
        %v330 = vunpack.c.0.s8 %v329
        %v331 = vlaneseq
        %v332 = vshrl.u32 %v331, 7
        %v333 = vsub.s32 %v330, %v332
        %v334 = vrot.slane %v327, %v333
        %335 = vrot.lane.b32.xlu0 %v334, 126
        %v336 = vpop.permute.xlu0 %335
        %vm338 = vcmask 11266
        %339 = vst.msk [vmem:[#allocation4] sm:$0xc] %vm338, %v336
        %v340 = vcombine.low %v308, %v308
        %v342 = vunpack.c.l.s4 1983009808
        %v343 = vunpack.c.0.s8 %v342
        %v344 = vlaneseq
        %v345 = vshrl.u32 %v344, 7
        %v346 = vsub.s32 %v343, %v345
        %v347 = vrot.slane %v340, %v346
        %348 = vrot.lane.b32.xlu0 %v347, 2
        %v349 = vpop.permute.xlu0 %348
        %vm351 = vcmask 125970
        %352 = vst.msk [vmem:[#allocation4] sm:$0xc] %vm351, %v349
        %vm353 = vcmask 123904
        %354 = vst.msk [vmem:[#allocation4 + $0x4] sm:$0x3] %vm353, %v308
        %v355 = vld [vmem:[%s1] sm:$0xf]
        %v356 = vld [vmem:[#allocation4] sm:$0xf]
        %v357 = vld [vmem:[#allocation4 + $0x4] sm:$0x3]
        %v358 = vld [vmem:[%s2] sm:$0xff]
        %360 = vset.pattern.permute.xlu0 0
        %361 = vperm.xlu0 %360, %v358
        %v362 = vpop.permute.xlu0 %361
        %v366 = vunpack.c.l.b16 %v356
        %v367 = vunpack.c.l.b16 %v357
        %v368 = vpack.c.b16 %v367, %v366
        %vm369 = vcmask 97280
        %v371 = vsel %vm369, %v355, 0
        %vm373 = vcmask 1045504
        %v375 = vsel %vm373, %v368, 0
        %377 = vmatprep.subr.bf16.mxu0 0
        %378 = vmatpush1.bf16.msra.mxu0 %v375
        %379 = vmatprep.subr.bf16.mxu0 0
        %380 = vmatpush1.bf16.msra.mxu0 0
        %381 = vmatprep.subr.bf16.mxu0 0
        %382 = vmatpush1.bf16.msra.mxu0 0
        %383 = vmatprep.subr.bf16.mxu0 0
        %384 = vmatpush1.bf16.msra.mxu0 0
        %385 = vmatprep.subr.bf16.mxu0 0
        %386 = vmatpush1.bf16.msra.mxu0 0
        %387 = vmatprep.subr.bf16.mxu0 0
        %388 = vmatpush1.bf16.msra.mxu0 0
        %389 = vmatprep.subr.bf16.mxu0 0
        %390 = vmatpush1.bf16.msra.mxu0 0
        %391 = vmatprep.subr.bf16.mxu0 0
        %392 = vmatpush1.bf16.msra.mxu0 0
        %393 = vmatprep.subr.bf16.mxu0 0
        %394 = vmatpush1.bf16.msra.mxu0 0
        %395 = vmatprep.subr.bf16.mxu0 0
        %396 = vmatpush1.bf16.msra.mxu0 0
        %397 = vmatprep.subr.bf16.mxu0 0
        %398 = vmatpush1.bf16.msra.mxu0 0
        %399 = vmatprep.subr.bf16.mxu0 0
        %400 = vmatpush1.bf16.msra.mxu0 0
        %401 = vmatprep.subr.bf16.mxu0 0
        %402 = vmatpush1.bf16.msra.mxu0 0
        %403 = vmatprep.subr.bf16.mxu0 0
        %404 = vmatpush1.bf16.msra.mxu0 0
        %405 = vmatprep.subr.bf16.mxu0 0
        %406 = vmatpush1.bf16.msra.mxu0 0
        %407 = vmatprep.subr.bf16.mxu0 0
        %408 = vmatpush1.bf16.msra.mxu0 0
        %409 = vmatprep.mubr.bf16.mxu0 0
        %410 = vmatmul.mubr.bf16.gmra.mrb[0].mxu0 %v371
        %v411 = vpop.f32.mrb[0].mxu0
        %v412 = vadd.f32 %v362, %v411
        %v413 = vpop.f32.mrb[0].mxu0
        %v414 = vpop.f32.mrb[0].mxu0
        %v415 = vpop.f32.mrb[0].mxu0
        %416 = vdwg.mxu0
        %v417 = vmax.f32 %v412, 0.0
        %v418 = vpack.c.bf16 %v417, %v417
        %v419 = vld [vmem:[#allocation3] sm:$0xf]
        %vm420 = vcmask 27648
        %421 = vst.msk [vmem:[#allocation5] sm:$0xf] %vm420, %v419
        %v423 = vunpack.c.l.b16 %v418
        %v424 = vpack.c.b16 %v423, %v423
        %425 = vrot.lane.b32.xlu0 %v424, 4
        %v426 = vpop.permute.xlu0 %425
        %vm428 = vcmask 125984
        %429 = vst.msk [vmem:[#allocation5] sm:$0xf] %vm428, %v426
        %v430 = vld [vmem:[#allocation3] sm:$0xf]
        %432 = vrot.lane.b32.xlu0 %v430, 126
        %v433 = vpop.permute.xlu0 %432
        %vm435 = vcmask 11264
        %436 = vst.msk [vmem:[#allocation5 + $0x4] sm:$0xf] %vm435, %v433
        %437 = vrot.lane.b32.xlu0 %v424, 2
        %v438 = vpop.permute.xlu0 %437
        %vm440 = vcmask 125968
        %441 = vst.msk [vmem:[#allocation5 + $0x4] sm:$0xf] %vm440, %v438
        %vm442 = vcmask 125952
        %443 = vst.msk [vmem:[#allocation5 + $0x8] sm:$0xf] %vm442, %v418
        %v444 = vld [vmem:[%s3] sm:$0xf]
        %v445 = vld [vmem:[#allocation5] sm:$0xf]
        %v446 = vld [vmem:[#allocation5 + $0x4] sm:$0xf]
        %v447 = vld [vmem:[#allocation5 + $0x8] sm:$0xf]
        %v448 = vld [vmem:[%s4] sm:$0xff]
        %450 = vset.pattern.permute.xlu0 0
        %451 = vperm.xlu0 %450, %v448
        %v452 = vpop.permute.xlu0 %451
        %v457 = vunpack.c.l.b16 %v445
        %v458 = vunpack.c.l.b16 %v446
        %v459 = vunpack.c.l.b16 %v447
        %v460 = vpack.c.b16 %v458, %v457
        %v461 = vpack.c.b16 %v459, %v459
        %vm463 = vcmask 195584
        %v465 = vsel %vm463, %v444, 0
        %vm467 = vcmask 1043456
        %v469 = vsel %vm467, %v461, 0
        %471 = vmatprep.subr.bf16.mxu0 0
        %472 = vmatpush1.bf16.msra.mxu0 %v460
        %473 = vmatprep.subr.bf16.mxu0 0
        %474 = vmatpush1.bf16.msra.mxu0 %v469
        %475 = vmatprep.subr.bf16.mxu0 0
        %476 = vmatpush1.bf16.msra.mxu0 0
        %477 = vmatprep.subr.bf16.mxu0 0
        %478 = vmatpush1.bf16.msra.mxu0 0
        %479 = vmatprep.subr.bf16.mxu0 0
        %480 = vmatpush1.bf16.msra.mxu0 0
        %481 = vmatprep.subr.bf16.mxu0 0
        %482 = vmatpush1.bf16.msra.mxu0 0
        %483 = vmatprep.subr.bf16.mxu0 0
        %484 = vmatpush1.bf16.msra.mxu0 0
        %485 = vmatprep.subr.bf16.mxu0 0
        %486 = vmatpush1.bf16.msra.mxu0 0
        %487 = vmatprep.subr.bf16.mxu0 0
        %488 = vmatpush1.bf16.msra.mxu0 0
        %489 = vmatprep.subr.bf16.mxu0 0
        %490 = vmatpush1.bf16.msra.mxu0 0
        %491 = vmatprep.subr.bf16.mxu0 0
        %492 = vmatpush1.bf16.msra.mxu0 0
        %493 = vmatprep.subr.bf16.mxu0 0
        %494 = vmatpush1.bf16.msra.mxu0 0
        %495 = vmatprep.subr.bf16.mxu0 0
        %496 = vmatpush1.bf16.msra.mxu0 0
        %497 = vmatprep.subr.bf16.mxu0 0
        %498 = vmatpush1.bf16.msra.mxu0 0
        %499 = vmatprep.subr.bf16.mxu0 0
        %500 = vmatpush1.bf16.msra.mxu0 0
        %501 = vmatprep.subr.bf16.mxu0 0
        %502 = vmatpush1.bf16.msra.mxu0 0
        %503 = vmatprep.mubr.bf16.mxu0 0
        %504 = vmatmul.mubr.bf16.gmra.mrb[0].mxu0 %v465
        %v505 = vpop.f32.mrb[0].mxu0
        %v506 = vadd.f32 %v452, %v505
        %v507 = vpop.f32.mrb[0].mxu0
        %v508 = vpop.f32.mrb[0].mxu0
        %v509 = vpop.f32.mrb[0].mxu0
        %510 = vdwg.mxu0
        %v511 = vmax.f32 %v506, 0.0
        %v512 = vld [vmem:[%s5] sm:$0xf]
        %v513 = vld [vmem:[%s6] sm:$0xff]
        %515 = vset.pattern.permute.xlu0 0
        %516 = vperm.xlu0 %515, %v513
        %v517 = vpop.permute.xlu0 %516
        %vm519 = vcmask 31744
        %v521 = vsel %vm519, %v512, 0
        %vm523 = vcmask 1041408
        %v525 = vsel %vm523, %v308, 0
        %527 = vmatprep.subr.bf16.mxu0 0
        %528 = vmatpush1.bf16.msra.mxu0 %v525
        %529 = vmatprep.subr.bf16.mxu0 0
        %530 = vmatpush1.bf16.msra.mxu0 0
        %531 = vmatprep.subr.bf16.mxu0 0
        %532 = vmatpush1.bf16.msra.mxu0 0
        %533 = vmatprep.subr.bf16.mxu0 0
        %534 = vmatpush1.bf16.msra.mxu0 0
        %535 = vmatprep.subr.bf16.mxu0 0
        %536 = vmatpush1.bf16.msra.mxu0 0
        %537 = vmatprep.subr.bf16.mxu0 0
        %538 = vmatpush1.bf16.msra.mxu0 0
        %539 = vmatprep.subr.bf16.mxu0 0
        %540 = vmatpush1.bf16.msra.mxu0 0
        %541 = vmatprep.subr.bf16.mxu0 0
        %542 = vmatpush1.bf16.msra.mxu0 0
        %543 = vmatprep.subr.bf16.mxu0 0
        %544 = vmatpush1.bf16.msra.mxu0 0
        %545 = vmatprep.subr.bf16.mxu0 0
        %546 = vmatpush1.bf16.msra.mxu0 0
        %547 = vmatprep.subr.bf16.mxu0 0
        %548 = vmatpush1.bf16.msra.mxu0 0
        %549 = vmatprep.subr.bf16.mxu0 0
        %550 = vmatpush1.bf16.msra.mxu0 0
        %551 = vmatprep.subr.bf16.mxu0 0
        %552 = vmatpush1.bf16.msra.mxu0 0
        %553 = vmatprep.subr.bf16.mxu0 0
        %554 = vmatpush1.bf16.msra.mxu0 0
        %555 = vmatprep.subr.bf16.mxu0 0
        %556 = vmatpush1.bf16.msra.mxu0 0
        %557 = vmatprep.subr.bf16.mxu0 0
        %558 = vmatpush1.bf16.msra.mxu0 0
        %559 = vmatprep.mubr.bf16.mxu0 0
        %560 = vmatmul.mubr.bf16.gmra.mrb[0].mxu0 %v521
        %v561 = vpop.f32.mrb[0].mxu0
        %v562 = vadd.f32 %v517, %v561
        %v563 = vpop.f32.mrb[0].mxu0
        %v564 = vpop.f32.mrb[0].mxu0
        %v565 = vpop.f32.mrb[0].mxu0
        %566 = vdwg.mxu0
        %v567 = vadd.f32 %v511, %v562
        %v568 = vmax.f32 %v567, 0.0
        %v569 = vpack.c.bf16 %v568, %v568
        %570 = vst.msk [vmem:[%s291] sm:$0xf] %vm442, %v569
        %s571 = sand.u32 %s197, 1
        %s572 = scalar_lea.sflag [#allocation7], %s571
        %s573 = sand.u32 %s197, 1
        %s574 = smul.addr %s573, 4
        %s575 = scalar_lea.vmem [#allocation6], %s574
        // Predicated region
        $region53: #{tpu_custom_call.1} parent=47 // pred_check
          %p576 = pneg %p207
        $region54: #{tpu_custom_call.1} parent=47 // pred_check_branch
          %578 = sbr.rel (%p576) target = $region56
        $region55: #{tpu_custom_call.1} parent=47 // pred_region
          %s580 = ssub.s32 64, 64
          %581 = vsyncadd %s572, %s580
          %s582 = sadd.s32 %s26, %s25
          %s583 = smul.addr %s582, 64
          %s584 = scalar_lea.hbm %s7, %s583
          %s586 = sshll.u32 %s575, 4
          %s587 = int_to_ptr.vmem [resolvable:$true] %s586
          %589 = dma.vmem_to_hbm [thread:$0]  %s587, 64, %s584, %s572
        $region56: #{tpu_custom_call.1} parent=47 // pred_fallthru
          _
      $region48: #{tpu_custom_call.1} parent=5 // pred_fallthru
        _
      %p590 = scmp.le.s32.totalorder 2, %s16
      // Predicated region
      $region57: #{tpu_custom_call.1} parent=5 // pred_check
        %p591 = pneg %p590
      $region58: #{tpu_custom_call.1} parent=5 // pred_check_branch
        %593 = sbr.rel (%p591) target = $region60
      $region59: #{tpu_custom_call.1} parent=5 // pred_region
        %s594 = ssub.s32 %s16, 2
        // Predicated region
        $region61: #{tpu_custom_call.1} parent=59 // pred_check
          %p595 = pneg %p213
        $region62: #{tpu_custom_call.1} parent=59 // pred_check_branch
          %597 = sbr.rel (%p595) target = $region64
        $region63: #{tpu_custom_call.1} parent=59 // pred_region
          %s598 = sand.u32 %s198, 1
          %s599 = scalar_lea.sflag [#allocation7], %s598
          %s600 = sand.u32 %s198, 1
          %s601 = smul.addr %s600, 4
          %s602 = scalar_lea.vmem [#allocation6], %s601
          %603 = dma.done %s599, 64
        $region64: #{tpu_custom_call.1} parent=59 // pred_fallthru
          _
      $region60: #{tpu_custom_call.1} parent=5 // pred_fallthru
        _
    $region6: #{tpu_custom_call.1} parent=1 // loop_footer
      %s20 = sadd.s32 1, %s16
    $region7: #{tpu_custom_call.1} parent=1 // loop_footer_branch
      %15 = sbr.rel target = $region3
    $region8: #{tpu_custom_call.1} parent=1 // loop_exit
      _
    %604 = vsyncpa [#allocation7], 1
    %s605 = scalar_lea.sflag [#allocation7], 1
    %606 = vsyncpa %s605, 1

// kernel: tpu_custom_call.1
$region0: #{tpu_custom_call.1}
  #allocation0 [shape = 'u32[]', space=smem, size = 0x4, offset = 0x4, fixed_abs, tag = 'smem constant byte address 0x4 - core index']
  #allocation1 [shape = 'u32[144,128]{1,0:T(1,128)}', space=vmem, size = 0x12000, scoped, tag = 'internal scratch']
  #allocation2 [shape = 'bf16[4,4]{1,0:T(4,128)(2,1)}', space=vmem, size = 0x400, scoped, tag = 'scratch operand']
  #allocation3 [shape = 'bf16[8,4]{1,0:T(8,128)(2,1)}', space=vmem, size = 0x800, scoped, tag = 'scratch operand']
  #allocation4 [shape = 'bf16[12,16]{1,0:T(8,128)(2,1)}', space=vmem, size = 0x1000, scoped, tag = 'scratch operand']
  #allocation5 [shape = 'bf16[24,16]{1,0:T(8,128)(2,1)}', space=vmem, size = 0x1800, scoped, tag = 'scratch operand']
  %s0 = inlined_call_operand.vmem [shape: bf16[2,4,16], index: 0, kind: input, shape index: {}]
  %s1 = inlined_call_operand.vmem [shape: bf16[8,12], index: 1, kind: input, shape index: {}]
  %s2 = inlined_call_operand.vmem [shape: f32[8,1], index: 2, kind: input, shape index: {}]
  %s3 = inlined_call_operand.vmem [shape: bf16[8,24], index: 3, kind: input, shape index: {}]
  %s4 = inlined_call_operand.vmem [shape: f32[8,1], index: 4, kind: input, shape index: {}]
  %s5 = inlined_call_operand.vmem [shape: bf16[8,4], index: 5, kind: input, shape index: {}]
  %s6 = inlined_call_operand.vmem [shape: f32[8,1], index: 6, kind: input, shape index: {}]
  %s7 = inlined_call_operand.hbm [shape: bf16[2,8,16], index: 7, kind: output, shape index: {}]
  %s8 = sld [smem:[#allocation0]]
  $region65: #{tpu_custom_call.1} parent=0
    _
  %s10 = ssub.s32 1, %s8
  %s11 = scalar_select 0, %s10, %s8
  $region1: #{tpu_custom_call.1} parent=0
    #allocation6 [shape = 'u8[4096]{0}', space=vmem, size = 0x1000, scoped, tag = 'output window, operand 0']
    #allocation7 [shape = 's32[2]{0}', space=sflag, size = 0x8, scoped, tag = 'scoped memory for tpu_custom_call.1']
    %12 = vsyncpa [#allocation7], 0
    %s13 = scalar_lea.sflag [#allocation7], 1
    %14 = vsyncpa %s13, 0
    loop: start=0, step=1, limit=4
    $region2: #{tpu_custom_call.1} parent=1 // loop_pre_header
      _
    $region3: #{tpu_custom_call.1} parent=1 // loop_header
      %s16 = sphi 0, %s20
      %p17 = scmp.ge.s32.totalorder %s16, 4
      %s23 = sphi 0, %s35
      %s24 = sphi 0, %s31
      %s25 = sphi 0, %s23
      %s26 = sphi 0, %s24
      %s27 = sphi 0, %s25
      %s28 = sphi 0, %s26
      %s40 = sphi 0, %s42
      %s43 = sphi 0, %s40
      %s44 = sphi 0, %s43
      %s60 = sphi 0, %s44
      %s64 = sphi 0, %s64
      %s66 = sphi 0, %s64
      %s67 = sphi 0, %s66
      %s81 = sphi 0, %s67
      %s85 = sphi 0, %s85
      %s87 = sphi 0, %s85
      %s88 = sphi 0, %s87
      %s102 = sphi 0, %s88
      %s106 = sphi 0, %s106
      %s108 = sphi 0, %s106
      %s109 = sphi 0, %s108
      %s123 = sphi 0, %s109
      %s127 = sphi 0, %s127
      %s129 = sphi 0, %s127
      %s130 = sphi 0, %s129
      %s144 = sphi 0, %s130
      %s148 = sphi 0, %s148
      %s150 = sphi 0, %s148
      %s151 = sphi 0, %s150
      %s165 = sphi 0, %s151
      %s169 = sphi 0, %s169
      %s171 = sphi 0, %s169
      %s172 = sphi 0, %s171
      %s186 = sphi 0, %s172
      %s194 = sphi 0, %s196
      %s197 = sphi 0, %s194
      %s198 = sphi 0, %s197
      %s214 = sphi 0, %s198
    $region4: #{tpu_custom_call.1} parent=1 // loop_header_branch
      %19 = sbr.rel (%p17) target = $region8
    $region5: #{tpu_custom_call.1} parent=1 // loop_body
      %s21 = ssub.s32 %s16, 1
      %s22 = ssub.s32 %s16, 2
      %s29 = sadd.s32 1, %s24
      %p30 = scmp.ge.s32.totalorder %s29, 1
      %s31 = scalar_select %p30, 0, %s29
      %s32 = sadd.s32 1, %s23
      %s33 = scalar_select %p30, %s32, %s23
      %p34 = scmp.ge.s32.totalorder %s33, 2
      %s35 = scalar_select %p34, 0, %s33
      %s36 = ssub.s32 %s23, %s35
      %s37 = ssub.s32 %s24, %s31
      %s38 = sor.u32 %s36, %s37
      %p39 = scmp.eq.s32.totalorder %s38, 0
      %s41 = sadd.s32 %s40, 1
      %s42 = scalar_select %p39, %s40, %s41
      %p45 = pneg %p39
      %p46 = scmp.eq.s32.totalorder %s16, 1
      %p47 = por %p45, %p46
      %p48 = scmp.ne.s32.totalorder %s40, %s43
      %p49 = scmp.eq.s32.totalorder %s16, 0
      %p50 = por %p48, %p49
      %p51 = scmp.ne.s32.totalorder %s40, %s43
      %p52 = scmp.eq.s32.totalorder %s21, 1
      %p53 = por %p51, %p52
      %p54 = scmp.ne.s32.totalorder %s43, %s44
      %p55 = scmp.eq.s32.totalorder %s21, 0
      %p56 = por %p54, %p55
      %p57 = scmp.ne.s32.totalorder %s43, %s44
      %p58 = scmp.eq.s32.totalorder %s22, 1
      %p59 = por %p57, %p58
      %p61 = scmp.ne.s32.totalorder %s44, %s60
      %p62 = scmp.eq.s32.totalorder %s22, 0
      %p63 = por %p61, %p62
      %s65 = sadd.s32 %s64, 1
      %p68 = scmp.eq.s32.totalorder %s16, 1
      %p69 = scmp.ne.s32.totalorder %s64, %s66
      %p70 = scmp.eq.s32.totalorder %s16, 0
      %p71 = por %p69, %p70
      %p72 = scmp.ne.s32.totalorder %s64, %s66
      %p73 = scmp.eq.s32.totalorder %s21, 1
      %p74 = por %p72, %p73
      %p75 = scmp.ne.s32.totalorder %s66, %s67
      %p76 = scmp.eq.s32.totalorder %s21, 0
      %p77 = por %p75, %p76
      %p78 = scmp.ne.s32.totalorder %s66, %s67
      %p79 = scmp.eq.s32.totalorder %s22, 1
      %p80 = por %p78, %p79
      %p82 = scmp.ne.s32.totalorder %s67, %s81
      %p83 = scmp.eq.s32.totalorder %s22, 0
      %p84 = por %p82, %p83
      %s86 = sadd.s32 %s85, 1
      %p89 = scmp.eq.s32.totalorder %s16, 1
      %p90 = scmp.ne.s32.totalorder %s85, %s87
      %p91 = scmp.eq.s32.totalorder %s16, 0
      %p92 = por %p90, %p91
      %p93 = scmp.ne.s32.totalorder %s85, %s87
      %p94 = scmp.eq.s32.totalorder %s21, 1
      %p95 = por %p93, %p94
      %p96 = scmp.ne.s32.totalorder %s87, %s88
      %p97 = scmp.eq.s32.totalorder %s21, 0
      %p98 = por %p96, %p97
      %p99 = scmp.ne.s32.totalorder %s87, %s88
      %p100 = scmp.eq.s32.totalorder %s22, 1
      %p101 = por %p99, %p100
      %p103 = scmp.ne.s32.totalorder %s88, %s102
      %p104 = scmp.eq.s32.totalorder %s22, 0
      %p105 = por %p103, %p104
      %s107 = sadd.s32 %s106, 1
      %p110 = scmp.eq.s32.totalorder %s16, 1
      %p111 = scmp.ne.s32.totalorder %s106, %s108
      %p112 = scmp.eq.s32.totalorder %s16, 0
      %p113 = por %p111, %p112
      %p114 = scmp.ne.s32.totalorder %s106, %s108
      %p115 = scmp.eq.s32.totalorder %s21, 1
      %p116 = por %p114, %p115
      %p117 = scmp.ne.s32.totalorder %s108, %s109
      %p118 = scmp.eq.s32.totalorder %s21, 0
      %p119 = por %p117, %p118
      %p120 = scmp.ne.s32.totalorder %s108, %s109
      %p121 = scmp.eq.s32.totalorder %s22, 1
      %p122 = por %p120, %p121
      %p124 = scmp.ne.s32.totalorder %s109, %s123
      %p125 = scmp.eq.s32.totalorder %s22, 0
      %p126 = por %p124, %p125
      %s128 = sadd.s32 %s127, 1
      %p131 = scmp.eq.s32.totalorder %s16, 1
      %p132 = scmp.ne.s32.totalorder %s127, %s129
      %p133 = scmp.eq.s32.totalorder %s16, 0
      %p134 = por %p132, %p133
      %p135 = scmp.ne.s32.totalorder %s127, %s129
      %p136 = scmp.eq.s32.totalorder %s21, 1
      %p137 = por %p135, %p136
      %p138 = scmp.ne.s32.totalorder %s129, %s130
      %p139 = scmp.eq.s32.totalorder %s21, 0
      %p140 = por %p138, %p139
      %p141 = scmp.ne.s32.totalorder %s129, %s130
      %p142 = scmp.eq.s32.totalorder %s22, 1
      %p143 = por %p141, %p142
      %p145 = scmp.ne.s32.totalorder %s130, %s144
      %p146 = scmp.eq.s32.totalorder %s22, 0
      %p147 = por %p145, %p146
      %s149 = sadd.s32 %s148, 1
      %p152 = scmp.eq.s32.totalorder %s16, 1
      %p153 = scmp.ne.s32.totalorder %s148, %s150
      %p154 = scmp.eq.s32.totalorder %s16, 0
      %p155 = por %p153, %p154
      %p156 = scmp.ne.s32.totalorder %s148, %s150
      %p157 = scmp.eq.s32.totalorder %s21, 1
      %p158 = por %p156, %p157
      %p159 = scmp.ne.s32.totalorder %s150, %s151
      %p160 = scmp.eq.s32.totalorder %s21, 0
      %p161 = por %p159, %p160
      %p162 = scmp.ne.s32.totalorder %s150, %s151
      %p163 = scmp.eq.s32.totalorder %s22, 1
      %p164 = por %p162, %p163
      %p166 = scmp.ne.s32.totalorder %s151, %s165
      %p167 = scmp.eq.s32.totalorder %s22, 0
      %p168 = por %p166, %p167
      %s170 = sadd.s32 %s169, 1
      %p173 = scmp.eq.s32.totalorder %s16, 1
      %p174 = scmp.ne.s32.totalorder %s169, %s171
      %p175 = scmp.eq.s32.totalorder %s16, 0
      %p176 = por %p174, %p175
      %p177 = scmp.ne.s32.totalorder %s169, %s171
      %p178 = scmp.eq.s32.totalorder %s21, 1
      %p179 = por %p177, %p178
      %p180 = scmp.ne.s32.totalorder %s171, %s172
      %p181 = scmp.eq.s32.totalorder %s21, 0
      %p182 = por %p180, %p181
      %p183 = scmp.ne.s32.totalorder %s171, %s172
      %p184 = scmp.eq.s32.totalorder %s22, 1
      %p185 = por %p183, %p184
      %p187 = scmp.ne.s32.totalorder %s172, %s186
      %p188 = scmp.eq.s32.totalorder %s22, 0
      %p189 = por %p187, %p188
      %s190 = ssub.s32 %s23, %s35
      %s191 = ssub.s32 %s24, %s31
      %s192 = sor.u32 %s190, %s191
      %p193 = scmp.eq.s32.totalorder %s192, 0
      %s195 = sadd.s32 %s194, 1
      %s196 = scalar_select %p193, %s194, %s195
      %p199 = pneg %p193
      %p200 = scmp.eq.s32.totalorder %s16, 1
      %p201 = por %p199, %p200
      %p202 = scmp.ne.s32.totalorder %s194, %s197
      %p203 = scmp.eq.s32.totalorder %s16, 0
      %p204 = por %p202, %p203
      %p205 = scmp.ne.s32.totalorder %s194, %s197
      %p206 = scmp.eq.s32.totalorder %s21, 1
      %p207 = por %p205, %p206
      %p208 = scmp.ne.s32.totalorder %s197, %s198
      %p209 = scmp.eq.s32.totalorder %s21, 0
      %p210 = por %p208, %p209
      %p211 = scmp.ne.s32.totalorder %s197, %s198
      %p212 = scmp.eq.s32.totalorder %s22, 1
      %p213 = por %p211, %p212
      %p215 = scmp.ne.s32.totalorder %s198, %s214
      %p216 = scmp.eq.s32.totalorder %s22, 0
      %p217 = por %p215, %p216
      %p218 = scmp.le.s32.totalorder 1, %s16
      %p219 = scmp.lt.s32.totalorder %s16, 3
      %p220 = pnand %p218, %p219
      %p221 = pneg %p220
      // Predicated region
      $region9: #{tpu_custom_call.1} parent=5 // pred_check
        _
      $region10: #{tpu_custom_call.1} parent=5 // pred_check_branch
        %223 = sbr.rel (%p220) target = $region12
      $region11: #{tpu_custom_call.1} parent=5 // pred_region
        %s224 = ssub.s32 %s16, 1
        // Predicated region
        $region13: #{tpu_custom_call.1} parent=11 // pred_check
          %p225 = pneg %p77
        $region14: #{tpu_custom_call.1} parent=11 // pred_check_branch
          %227 = sbr.rel (%p225) target = $region16
        $region15: #{tpu_custom_call.1} parent=11 // pred_region
          _
        $region16: #{tpu_custom_call.1} parent=11 // pred_fallthru
          _
        // Predicated region
        $region17: #{tpu_custom_call.1} parent=11 // pred_check
          %p228 = pneg %p98
        $region18: #{tpu_custom_call.1} parent=11 // pred_check_branch
          %230 = sbr.rel (%p228) target = $region20
        $region19: #{tpu_custom_call.1} parent=11 // pred_region
          _
        $region20: #{tpu_custom_call.1} parent=11 // pred_fallthru
          _
        // Predicated region
        $region21: #{tpu_custom_call.1} parent=11 // pred_check
          %p231 = pneg %p119
        $region22: #{tpu_custom_call.1} parent=11 // pred_check_branch
          %233 = sbr.rel (%p231) target = $region24
        $region23: #{tpu_custom_call.1} parent=11 // pred_region
          _
        $region24: #{tpu_custom_call.1} parent=11 // pred_fallthru
          _
        // Predicated region
        $region25: #{tpu_custom_call.1} parent=11 // pred_check
          %p234 = pneg %p140
        $region26: #{tpu_custom_call.1} parent=11 // pred_check_branch
          %236 = sbr.rel (%p234) target = $region28
        $region27: #{tpu_custom_call.1} parent=11 // pred_region
          _
        $region28: #{tpu_custom_call.1} parent=11 // pred_fallthru
          _
        // Predicated region
        $region29: #{tpu_custom_call.1} parent=11 // pred_check
          %p237 = pneg %p161
        $region30: #{tpu_custom_call.1} parent=11 // pred_check_branch
          %239 = sbr.rel (%p237) target = $region32
        $region31: #{tpu_custom_call.1} parent=11 // pred_region
          _
        $region32: #{tpu_custom_call.1} parent=11 // pred_fallthru
          _
        // Predicated region
        $region33: #{tpu_custom_call.1} parent=11 // pred_check
          %p240 = pneg %p182
        $region34: #{tpu_custom_call.1} parent=11 // pred_check_branch
          %242 = sbr.rel (%p240) target = $region36
        $region35: #{tpu_custom_call.1} parent=11 // pred_region
          _
        $region36: #{tpu_custom_call.1} parent=11 // pred_fallthru
          _
      $region12: #{tpu_custom_call.1} parent=5 // pred_fallthru
        _
      %p243 = scmp.lt.s32.totalorder %s16, 2
      // Predicated region
      $region37: #{tpu_custom_call.1} parent=5 // pred_check
        %p244 = pneg %p243
      $region38: #{tpu_custom_call.1} parent=5 // pred_check_branch
        %246 = sbr.rel (%p244) target = $region40
      $region39: #{tpu_custom_call.1} parent=5 // pred_region
        // Predicated region
        $region41: #{tpu_custom_call.1} parent=39 // pred_check
          %p247 = pneg %p50
        $region42: #{tpu_custom_call.1} parent=39 // pred_check_branch
          %249 = sbr.rel (%p247) target = $region44
        $region43: #{tpu_custom_call.1} parent=39 // pred_region
          %p250 = scmp.lt.s32.totalorder %s23, 1
          %s251 = scalar_select %p250, %s23, 1
          %p252 = scmp.lt.s32.totalorder %s24, 0
          %s253 = scalar_select %p252, %s24, 0
          %s254 = sadd.s32 %s253, %s251
          %s255 = smul.addr %s254, 2
          %s256 = scalar_lea.vmem %s0, %s255
        $region44: #{tpu_custom_call.1} parent=39 // pred_fallthru
          _
      $region40: #{tpu_custom_call.1} parent=5 // pred_fallthru
        _
      %p257 = scmp.le.s32.totalorder 1, %s16
      %p258 = scmp.lt.s32.totalorder %s16, 3
      %p259 = pnand %p257, %p258
      %p260 = pneg %p259
      // Predicated region
      $region45: #{tpu_custom_call.1} parent=5 // pred_check
        _
      $region46: #{tpu_custom_call.1} parent=5 // pred_check_branch
        %262 = sbr.rel (%p259) target = $region48
      $region47: #{tpu_custom_call.1} parent=5 // pred_region
        %s263 = ssub.s32 %s16, 1
        %p264 = scmp.lt.s32.totalorder %s25, 1
        %s265 = scalar_select %p264, %s25, 1
        %p266 = scmp.lt.s32.totalorder %s26, 0
        %s267 = scalar_select %p266, %s26, 0
        %s268 = sadd.s32 %s267, %s265
        %s269 = smul.addr %s268, 2
        %s270 = scalar_lea.vmem %s0, %s269
        %p271 = pneg %p56
        %p272 = pneg %p53
        %p273 = pneg %p77
        %p274 = pneg %p74
        %p275 = pneg %p98
        %p276 = pneg %p95
        %p277 = pneg %p119
        %p278 = pneg %p116
        %p279 = pneg %p140
        %p280 = pneg %p137
        %p281 = pneg %p161
        %p282 = pneg %p158
        %p283 = pneg %p182
        %p284 = pneg %p179
        %p285 = pneg %p210
        %p286 = pneg %p207
        %s287 = sand.u32 %s197, 1
        %s288 = scalar_lea.sflag [#allocation7], %s287
        %s289 = sand.u32 %s197, 1
        %s290 = smul.addr %s289, 4
        %s291 = scalar_lea.vmem [#allocation6], %s290
        %p292 = scmp.lt.s32.totalorder %s25, 1
        %s293 = scalar_select %p292, %s25, 1
        %p294 = scmp.lt.s32.totalorder %s26, 0
        %s295 = scalar_select %p294, %s26, 0
        %s296 = sadd.s32 %s295, %s293
        %s297 = smul.addr %s296, 2
        %s298 = scalar_lea.vmem %s0, %s297
        %p300 = scmp.eq.s32.totalorder %s26, 0
        // Predicated region
        $region49: #{tpu_custom_call.1} parent=47 // pred_check
          %p301 = pneg %p300
        $region50: #{tpu_custom_call.1} parent=47 // pred_check_branch
          %303 = sbr.rel (%p301) target = $region52
        $region51: #{tpu_custom_call.1} parent=47 // pred_region
          %vm304 = vcmask 25600
          %305 = vst.msk [vmem:[#allocation2] sm:$0x3] %vm304, 0
          %vm306 = vcmask 27648
          %307 = vst.msk [vmem:[#allocation3] sm:$0xf] %vm306, 0
        $region52: #{tpu_custom_call.1} parent=47 // pred_fallthru
          _
        %v308 = vld [vmem:[%s298] sm:$0x3]
        %v309 = vld [vmem:[#allocation2] sm:$0x3]
        %vm310 = vcmask 25600
        %311 = vst.msk [vmem:[#allocation4] sm:$0x3] %vm310, %v309
        %v314 = vunpack.c.l.s4 1983009808
        %v315 = vunpack.c.0.s8 %v314
        %v316 = vlaneseq
        %v317 = vshrl.u32 %v316, 7
        %v318 = vsub.s32 %v315, %v317
        %v319 = vrot.slane %v308, %v318
        %320 = vrot.lane.b32.xlu0 %v319, 4
        %v321 = vpop.permute.xlu0 %320
        %vm323 = vcmask 123936
        %324 = vst.msk [vmem:[#allocation4] sm:$0x3] %vm323, %v321
        %v325 = vld [vmem:[#allocation2] sm:$0x3]
        %v327 = vcombine.low %v325, %v325
        %v329 = vunpack.c.l.s4 1983009808
        %v330 = vunpack.c.0.s8 %v329
        %v331 = vlaneseq
        %v332 = vshrl.u32 %v331, 7
        %v333 = vsub.s32 %v330, %v332
        %v334 = vrot.slane %v327, %v333
        %335 = vrot.lane.b32.xlu0 %v334, 126
        %v336 = vpop.permute.xlu0 %335
        %vm338 = vcmask 11266
        %339 = vst.msk [vmem:[#allocation4] sm:$0xc] %vm338, %v336
        %v340 = vcombine.low %v308, %v308
        %v342 = vunpack.c.l.s4 1983009808
        %v343 = vunpack.c.0.s8 %v342
        %v344 = vlaneseq
        %v345 = vshrl.u32 %v344, 7
        %v346 = vsub.s32 %v343, %v345
        %v347 = vrot.slane %v340, %v346
        %348 = vrot.lane.b32.xlu0 %v347, 2
        %v349 = vpop.permute.xlu0 %348
        %vm351 = vcmask 125970
        %352 = vst.msk [vmem:[#allocation4] sm:$0xc] %vm351, %v349
        %vm353 = vcmask 123904
        %354 = vst.msk [vmem:[#allocation4 + $0x4] sm:$0x3] %vm353, %v308
        %v355 = vld [vmem:[%s1] sm:$0xf]
        %v356 = vld [vmem:[#allocation4] sm:$0xf]
        %v357 = vld [vmem:[#allocation4 + $0x4] sm:$0x3]
        %v358 = vld [vmem:[%s2] sm:$0xff]
        %360 = vset.pattern.permute.xlu0 0
        %361 = vperm.xlu0 %360, %v358
        %v362 = vpop.permute.xlu0 %361
        %v366 = vunpack.c.l.b16 %v356
        %v367 = vunpack.c.l.b16 %v357
        %v368 = vpack.c.b16 %v367, %v366
        %vm369 = vcmask 97280
        %v371 = vsel %vm369, %v355, 0
        %vm373 = vcmask 1045504
        %v375 = vsel %vm373, %v368, 0
        %377 = vmatprep.subr.bf16.mxu0 0
        %378 = vmatpush1.bf16.msra.mxu0 %v375
        %379 = vmatprep.subr.bf16.mxu0 0
        %380 = vmatpush1.bf16.msra.mxu0 0
        %381 = vmatprep.subr.bf16.mxu0 0
        %382 = vmatpush1.bf16.msra.mxu0 0
        %383 = vmatprep.subr.bf16.mxu0 0
        %384 = vmatpush1.bf16.msra.mxu0 0
        %385 = vmatprep.subr.bf16.mxu0 0
        %386 = vmatpush1.bf16.msra.mxu0 0
        %387 = vmatprep.subr.bf16.mxu0 0
        %388 = vmatpush1.bf16.msra.mxu0 0
        %389 = vmatprep.subr.bf16.mxu0 0
        %390 = vmatpush1.bf16.msra.mxu0 0
        %391 = vmatprep.subr.bf16.mxu0 0
        %392 = vmatpush1.bf16.msra.mxu0 0
        %393 = vmatprep.subr.bf16.mxu0 0
        %394 = vmatpush1.bf16.msra.mxu0 0
        %395 = vmatprep.subr.bf16.mxu0 0
        %396 = vmatpush1.bf16.msra.mxu0 0
        %397 = vmatprep.subr.bf16.mxu0 0
        %398 = vmatpush1.bf16.msra.mxu0 0
        %399 = vmatprep.subr.bf16.mxu0 0
        %400 = vmatpush1.bf16.msra.mxu0 0
        %401 = vmatprep.subr.bf16.mxu0 0
        %402 = vmatpush1.bf16.msra.mxu0 0
        %403 = vmatprep.subr.bf16.mxu0 0
        %404 = vmatpush1.bf16.msra.mxu0 0
        %405 = vmatprep.subr.bf16.mxu0 0
        %406 = vmatpush1.bf16.msra.mxu0 0
        %407 = vmatprep.subr.bf16.mxu0 0
        %408 = vmatpush1.bf16.msra.mxu0 0
        %409 = vmatprep.mubr.bf16.mxu0 0
        %410 = vmatmul.mubr.bf16.gmra.mrb[0].mxu0 %v371
        %v411 = vpop.f32.mrb[0].mxu0
        %v412 = vadd.f32 %v362, %v411
        %v413 = vpop.f32.mrb[0].mxu0
        %v414 = vpop.f32.mrb[0].mxu0
        %v415 = vpop.f32.mrb[0].mxu0
        %416 = vdwg.mxu0
        %v417 = vmax.f32 %v412, 0.0
        %v418 = vpack.c.bf16 %v417, %v417
        %v419 = vld [vmem:[#allocation3] sm:$0xf]
        %vm420 = vcmask 27648
        %421 = vst.msk [vmem:[#allocation5] sm:$0xf] %vm420, %v419
        %v423 = vunpack.c.l.b16 %v418
        %v424 = vpack.c.b16 %v423, %v423
        %425 = vrot.lane.b32.xlu0 %v424, 4
        %v426 = vpop.permute.xlu0 %425
        %vm428 = vcmask 125984
        %429 = vst.msk [vmem:[#allocation5] sm:$0xf] %vm428, %v426
        %v430 = vld [vmem:[#allocation3] sm:$0xf]
        %432 = vrot.lane.b32.xlu0 %v430, 126
        %v433 = vpop.permute.xlu0 %432
        %vm435 = vcmask 11264
        %436 = vst.msk [vmem:[#allocation5 + $0x4] sm:$0xf] %vm435, %v433
        %437 = vrot.lane.b32.xlu0 %v424, 2
        %v438 = vpop.permute.xlu0 %437
        %vm440 = vcmask 125968
        %441 = vst.msk [vmem:[#allocation5 + $0x4] sm:$0xf] %vm440, %v438
        %vm442 = vcmask 125952
        %443 = vst.msk [vmem:[#allocation5 + $0x8] sm:$0xf] %vm442, %v418
        %v444 = vld [vmem:[%s3] sm:$0xf]
        %v445 = vld [vmem:[#allocation5] sm:$0xf]
        %v446 = vld [vmem:[#allocation5 + $0x4] sm:$0xf]
        %v447 = vld [vmem:[#allocation5 + $0x8] sm:$0xf]
        %v448 = vld [vmem:[%s4] sm:$0xff]
        %450 = vset.pattern.permute.xlu0 0
        %451 = vperm.xlu0 %450, %v448
        %v452 = vpop.permute.xlu0 %451
        %v457 = vunpack.c.l.b16 %v445
        %v458 = vunpack.c.l.b16 %v446
        %v459 = vunpack.c.l.b16 %v447
        %v460 = vpack.c.b16 %v458, %v457
        %v461 = vpack.c.b16 %v459, %v459
        %vm463 = vcmask 195584
        %v465 = vsel %vm463, %v444, 0
        %vm467 = vcmask 1043456
        %v469 = vsel %vm467, %v461, 0
        %471 = vmatprep.subr.bf16.mxu0 0
        %472 = vmatpush1.bf16.msra.mxu0 %v460
        %473 = vmatprep.subr.bf16.mxu0 0
        %474 = vmatpush1.bf16.msra.mxu0 %v469
        %475 = vmatprep.subr.bf16.mxu0 0
        %476 = vmatpush1.bf16.msra.mxu0 0
        %477 = vmatprep.subr.bf16.mxu0 0
        %478 = vmatpush1.bf16.msra.mxu0 0
        %479 = vmatprep.subr.bf16.mxu0 0
        %480 = vmatpush1.bf16.msra.mxu0 0
        %481 = vmatprep.subr.bf16.mxu0 0
        %482 = vmatpush1.bf16.msra.mxu0 0
        %483 = vmatprep.subr.bf16.mxu0 0
        %484 = vmatpush1.bf16.msra.mxu0 0
        %485 = vmatprep.subr.bf16.mxu0 0
        %486 = vmatpush1.bf16.msra.mxu0 0
        %487 = vmatprep.subr.bf16.mxu0 0
        %488 = vmatpush1.bf16.msra.mxu0 0
        %489 = vmatprep.subr.bf16.mxu0 0
        %490 = vmatpush1.bf16.msra.mxu0 0
        %491 = vmatprep.subr.bf16.mxu0 0
        %492 = vmatpush1.bf16.msra.mxu0 0
        %493 = vmatprep.subr.bf16.mxu0 0
        %494 = vmatpush1.bf16.msra.mxu0 0
        %495 = vmatprep.subr.bf16.mxu0 0
        %496 = vmatpush1.bf16.msra.mxu0 0
        %497 = vmatprep.subr.bf16.mxu0 0
        %498 = vmatpush1.bf16.msra.mxu0 0
        %499 = vmatprep.subr.bf16.mxu0 0
        %500 = vmatpush1.bf16.msra.mxu0 0
        %501 = vmatprep.subr.bf16.mxu0 0
        %502 = vmatpush1.bf16.msra.mxu0 0
        %503 = vmatprep.mubr.bf16.mxu0 0
        %504 = vmatmul.mubr.bf16.gmra.mrb[0].mxu0 %v465
        %v505 = vpop.f32.mrb[0].mxu0
        %v506 = vadd.f32 %v452, %v505
        %v507 = vpop.f32.mrb[0].mxu0
        %v508 = vpop.f32.mrb[0].mxu0
        %v509 = vpop.f32.mrb[0].mxu0
        %510 = vdwg.mxu0
        %v511 = vmax.f32 %v506, 0.0
        %v512 = vld [vmem:[%s5] sm:$0xf]
        %v513 = vld [vmem:[%s6] sm:$0xff]
        %515 = vset.pattern.permute.xlu0 0
        %516 = vperm.xlu0 %515, %v513
        %v517 = vpop.permute.xlu0 %516
        %vm519 = vcmask 31744
        %v521 = vsel %vm519, %v512, 0
        %vm523 = vcmask 1041408
        %v525 = vsel %vm523, %v308, 0
        %527 = vmatprep.subr.bf16.mxu0 0
        %528 = vmatpush1.bf16.msra.mxu0 %v525
        %529 = vmatprep.subr.bf16.mxu0 0
        %530 = vmatpush1.bf16.msra.mxu0 0
        %531 = vmatprep.subr.bf16.mxu0 0
        %532 = vmatpush1.bf16.msra.mxu0 0
        %533 = vmatprep.subr.bf16.mxu0 0
        %534 = vmatpush1.bf16.msra.mxu0 0
        %535 = vmatprep.subr.bf16.mxu0 0
        %536 = vmatpush1.bf16.msra.mxu0 0
        %537 = vmatprep.subr.bf16.mxu0 0
        %538 = vmatpush1.bf16.msra.mxu0 0
        %539 = vmatprep.subr.bf16.mxu0 0
        %540 = vmatpush1.bf16.msra.mxu0 0
        %541 = vmatprep.subr.bf16.mxu0 0
        %542 = vmatpush1.bf16.msra.mxu0 0
        %543 = vmatprep.subr.bf16.mxu0 0
        %544 = vmatpush1.bf16.msra.mxu0 0
        %545 = vmatprep.subr.bf16.mxu0 0
        %546 = vmatpush1.bf16.msra.mxu0 0
        %547 = vmatprep.subr.bf16.mxu0 0
        %548 = vmatpush1.bf16.msra.mxu0 0
        %549 = vmatprep.subr.bf16.mxu0 0
        %550 = vmatpush1.bf16.msra.mxu0 0
        %551 = vmatprep.subr.bf16.mxu0 0
        %552 = vmatpush1.bf16.msra.mxu0 0
        %553 = vmatprep.subr.bf16.mxu0 0
        %554 = vmatpush1.bf16.msra.mxu0 0
        %555 = vmatprep.subr.bf16.mxu0 0
        %556 = vmatpush1.bf16.msra.mxu0 0
        %557 = vmatprep.subr.bf16.mxu0 0
        %558 = vmatpush1.bf16.msra.mxu0 0
        %559 = vmatprep.mubr.bf16.mxu0 0
        %560 = vmatmul.mubr.bf16.gmra.mrb[0].mxu0 %v521
        %v561 = vpop.f32.mrb[0].mxu0
        %v562 = vadd.f32 %v517, %v561
        %v563 = vpop.f32.mrb[0].mxu0
        %v564 = vpop.f32.mrb[0].mxu0
        %v565 = vpop.f32.mrb[0].mxu0
        %566 = vdwg.mxu0
        %v567 = vadd.f32 %v511, %v562
        %v568 = vmax.f32 %v567, 0.0
        %v569 = vpack.c.bf16 %v568, %v568
        %570 = vst.msk [vmem:[%s291] sm:$0xf] %vm442, %v569
        %s571 = sand.u32 %s197, 1
        %s572 = scalar_lea.sflag [#allocation7], %s571
        %s573 = sand.u32 %s197, 1
        %s574 = smul.addr %s573, 4
        %s575 = scalar_lea.vmem [#allocation6], %s574
        // Predicated region
        $region53: #{tpu_custom_call.1} parent=47 // pred_check
          %p576 = pneg %p207
        $region54: #{tpu_custom_call.1} parent=47 // pred_check_branch
          %578 = sbr.rel (%p576) target = $region56
        $region55: #{tpu_custom_call.1} parent=47 // pred_region
          %s580 = ssub.s32 64, 64
          %581 = vsyncadd %s572, %s580
          %s582 = sadd.s32 %s26, %s25
          %s583 = smul.addr %s582, 64
          %s584 = scalar_lea.hbm %s7, %s583
          %s586 = sshll.u32 %s575, 4
          %s587 = int_to_ptr.vmem [resolvable:$true] %s586
          %589 = dma.vmem_to_hbm [thread:$0]  %s587, 64, %s584, %s572
        $region56: #{tpu_custom_call.1} parent=47 // pred_fallthru
          _
      $region48: #{tpu_custom_call.1} parent=5 // pred_fallthru
        _
      %p590 = scmp.le.s32.totalorder 2, %s16
      // Predicated region
      $region57: #{tpu_custom_call.1} parent=5 // pred_check
        %p591 = pneg %p590
      $region58: #{tpu_custom_call.1} parent=5 // pred_check_branch
        %593 = sbr.rel (%p591) target = $region60
      $region59: #{tpu_custom_call.1} parent=5 // pred_region
        %s594 = ssub.s32 %s16, 2
        // Predicated region
        $region61: #{tpu_custom_call.1} parent=59 // pred_check
          %p595 = pneg %p213
        $region62: #{tpu_custom_call.1} parent=59 // pred_check_branch
          %597 = sbr.rel (%p595) target = $region64
        $region63: #{tpu_custom_call.1} parent=59 // pred_region
          %s598 = sand.u32 %s198, 1
          %s599 = scalar_lea.sflag [#allocation7], %s598
          %s600 = sand.u32 %s198, 1
          %s601 = smul.addr %s600, 4
          %s602 = scalar_lea.vmem [#allocation6], %s601
          %603 = dma.done %s599, 64
        $region64: #{tpu_custom_call.1} parent=59 // pred_fallthru
          _
      $region60: #{tpu_custom_call.1} parent=5 // pred_fallthru
        _
    $region6: #{tpu_custom_call.1} parent=1 // loop_footer
      %s20 = sadd.s32 1, %s16
    $region7: #{tpu_custom_call.1} parent=1 // loop_footer_branch
      %15 = sbr.rel target = $region3
    $region8: #{tpu_custom_call.1} parent=1 // loop_exit
      _
    %604 = vsyncpa [#allocation7], 1
    %s605 = scalar_lea.sflag [#allocation7], 1
    %606 = vsyncpa %s605, 1

</llo_original>
